<compile_context>
chip_gen: v7x
topology: tpu7x:2x2x1
jax: 0.10.0
libtpu: 0.0.40
codegen_flags: <defaults>
</compile_context>

<pallas_src>
import math
import functools

import jax
import jax.numpy as jnp
from jax import lax
from jax.experimental import pallas as pl
from jax.experimental.pallas import tpu as pltpu

HIDDEN_NF = 32          # hidden_nf
EDGE_FEAT_NF = 2        # edge_feat_nf (distance + 1 external edge feature)
N_LAYERS = 2            # n_layers
NORMALIZATION_FACTOR = 100.0


def _silu(z):
    return z * jax.nn.sigmoid(z)


def _round_up(v, m):
    return (v + m - 1) // m * m


def eq_block_kernel(h_ref, x_ref, nmask_ref,
                    row_ref, col_ref, eattr_ref, emask_ref,
                    We1_hr_ref, We1_hc_ref, We1_d_ref, We1_e_ref, be1_ref,
                    We2_ref, be2_ref, Wa_ref, ba_ref,
                    Wn1_h_ref, Wn1_a_ref, bn1_ref, Wn2_ref, bn2_ref,
                    out_ref,
                    h_state, agg, hwr, hwc):
    f32 = jnp.float32
    l = pl.program_id(0)            # layer index
    k = pl.program_id(1)            # edge-tile index
    n_k = pl.num_programs(1)
    N = h_state.shape[0]
    TE = row_ref.shape[0]

    # ---- per-layer init: load h, zero accumulator, pre-transform h by W1 ----
    @pl.when(k == 0)
    def _init_layer():
        @pl.when(l == 0)
        def _():
            h_state[...] = h_ref[...]
        agg[...] = jnp.zeros_like(agg)
        # gather(h) @ W == gather(h @ W): do the K=H contraction once per layer
        # so the per-edge-tile matmuls contract over N (good MXU fill) instead
        # of K=32.
        hwr[...] = jnp.dot(h_state[...], We1_hr_ref[0], preferred_element_type=f32)
        hwc[...] = jnp.dot(h_state[...], We1_hc_ref[0], preferred_element_type=f32)

    # ---- edge tile: build one-hots in VMEM from streamed int32 indices ----
    r = row_ref[...]                                    # [TE, 1] int32
    c = col_ref[...]                                    # [TE, 1] int32
    ids = lax.broadcasted_iota(jnp.int32, (TE, N), 1)   # [TE, N]
    row_oh = (ids == r).astype(f32)                     # [TE, N]
    col_oh = (ids == c).astype(f32)                     # [TE, N]

    # coord2diff radial via a single fused matmul (only radial is consumed)
    diff = jnp.dot(row_oh - col_oh, x_ref[...], preferred_element_type=f32)  # [TE,3]
    radial = jnp.sum(diff * diff, axis=1, keepdims=True)                     # [TE,1]

    # edge MLP layer 1 (concat-free; gather fused with the first weight)
    z = (jnp.dot(row_oh, hwr[...], preferred_element_type=f32)
         + jnp.dot(col_oh, hwc[...], preferred_element_type=f32)
         + radial * We1_d_ref[0]
         + eattr_ref[...] * We1_e_ref[0]
         + be1_ref[0])
    m = _silu(z)
    mij = _silu(jnp.dot(m, We2_ref[0], preferred_element_type=f32) + be2_ref[0])

    # attention: sigmoid(Linear(mij)) — acts on post-SiLU mij, so it cannot be
    # folded into We2; small [TE,H] VPU mul + lane reduce.
    att = jax.nn.sigmoid(jnp.sum(mij * Wa_ref[0], axis=1, keepdims=True) + ba_ref[0])
    ef = mij * att * emask_ref[...]                     # [TE, H]

    # unsorted_segment_sum: contract the edge axis against the one-hot
    # (normalization 1/100 is folded into Wn1_a on the host).
    agg[...] += lax.dot_general(row_oh, ef, (((0,), (0,)), ((), ())),
                                preferred_element_type=f32)

    # ---- layer finalize: node MLP + residual, carry / emit h ----
    @pl.when(k == n_k - 1)
    def _finish_layer():
        nmask = nmask_ref[...]
        zn = (jnp.dot(h_state[...], Wn1_h_ref[0], preferred_element_type=f32)
              + jnp.dot(agg[...], Wn1_a_ref[0], preferred_element_type=f32)
              + bn1_ref[0])
        h_new = (h_state[...]
                 + jnp.dot(_silu(zn), Wn2_ref[0], preferred_element_type=f32)
                 + bn2_ref[0]) * nmask
        h_state[...] = h_new

        @pl.when(l == pl.num_programs(0) - 1)
        def _():
            out_ref[...] = h_new * nmask   # final node_mask (idempotent for 0/1)


def init_params(key, hidden_nf=HIDDEN_NF, edge_feat_nf=EDGE_FEAT_NF,
                n_layers=N_LAYERS):
    """Deterministic synthetic parameters (PyTorch-Linear-style uniform init)."""
    H = hidden_nf
    in_edge = 2 * H + edge_feat_nf
    in_node = 2 * H
    spec = [  # (name, shape, fan_in)
        ("We1", (in_edge, H), in_edge), ("be1", (1, H), in_edge),
        ("We2", (H, H), H),             ("be2", (1, H), H),
        ("Wa",  (1, H), H),             ("ba",  (1, 1), H),
        ("Wn1", (in_node, H), in_node), ("bn1", (1, H), in_node),
        ("Wn2", (H, H), H),             ("bn2", (1, H), H),
    ]
    params = {name: [] for name, _, _ in spec}
    k = key
    for _ in range(n_layers):
        for name, shape, fan_in in spec:
            k, sub = jax.random.split(k)
            bound = 1.0 / math.sqrt(fan_in)
            params[name].append(
                jax.random.uniform(sub, shape, jnp.float32, -bound, bound))
    return {name: jnp.stack(v) for name, v in params.items()}


@functools.partial(jax.jit, static_argnames=("edge_tile",))
def equivariant_block(h, x, row, col, edge_attr, node_mask, edge_mask, params,
                      edge_tile=256):
    N, H = h.shape
    E = row.shape[0]
    L = params["We1"].shape[0]

    # Edge-tile size: multiple of 8 sublanes; tune down for very large N so the
    # in-kernel [TE, N] one-hots stay inside the v7x 64 MiB VMEM budget.
    te = min(_round_up(edge_tile, 8), _round_up(E, 8))
    Ep = _round_up(E, te)
    pad = Ep - E
    n_tiles = Ep // te

    # Pad edges; padded edges point at node 0 and are killed by edge_mask=0.
    row_p = jnp.pad(row.astype(jnp.int32), (0, pad)).reshape(Ep, 1)
    col_p = jnp.pad(col.astype(jnp.int32), (0, pad)).reshape(Ep, 1)
    eattr_p = jnp.pad(edge_attr, ((0, pad), (0, 0)))
    emask_p = jnp.pad(edge_mask, ((0, pad), (0, 0)))

    # Split the concat-weights by input segment (concat-free kernel) and fold
    # the 'sum' normalization (1/100) into the agg branch of the node MLP.
    We1 = params["We1"]                       # [L, 2H+2, H]
    We1_hr = We1[:, :H, :]
    We1_hc = We1[:, H:2 * H, :]
    We1_d = We1[:, 2 * H:2 * H + 1, :]
    We1_e = We1[:, 2 * H + 1:2 * H + 2, :]
    Wn1 = params["Wn1"]                       # [L, 2H, H]
    Wn1_h = Wn1[:, :H, :]
    Wn1_a = Wn1[:, H:, :] / NORMALIZATION_FACTOR

    const = lambda shape: pl.BlockSpec(shape, lambda l, k, s=len(shape): (0,) * s)
    edge = lambda w: pl.BlockSpec((te, w), lambda l, k: (k, 0))
    per_layer = lambda s: pl.BlockSpec((1,) + s,
                                       lambda l, k, n=len(s): (l,) + (0,) * n)

    in_specs = [
        const((N, H)),       # h
        const((N, 3)),       # x
        const((N, 1)),       # node_mask
        edge(1),             # row indices
        edge(1),             # col indices
        edge(1),             # external edge attr
        edge(1),             # edge mask
        per_layer((H, H)),   # We1_hr
        per_layer((H, H)),   # We1_hc
        per_layer((1, H)),   # We1_d
        per_layer((1, H)),   # We1_e
        per_layer((1, H)),   # be1
        per_layer((H, H)),   # We2
        per_layer((1, H)),   # be2
        per_layer((1, H)),   # Wa
        per_layer((1, 1)),   # ba
        per_layer((H, H)),   # Wn1_h
        per_layer((H, H)),   # Wn1_a (pre-scaled by 1/normalization_factor)
        per_layer((1, H)),   # bn1
        per_layer((H, H)),   # Wn2
        per_layer((1, H)),   # bn2
    ]

    flops = L * (2 * Ep * N * (3 * H + 3) + 2 * Ep * H * H + 10 * N * H * H)
    cost = pl.CostEstimate(
        flops=int(flops),
        transcendentals=int(L * (2 * Ep * H + Ep + N * H)),
        bytes_accessed=int(4 * (2 * N * H + 3 * N + 4 * Ep
                                + L * (5 * H * H + 7 * H + 1))),
    )

    out_h = pl.pallas_call(
        eq_block_kernel,
        out_shape=jax.ShapeDtypeStruct((N, H), jnp.float32),
        grid=(L, n_tiles),
        in_specs=in_specs,
        out_specs=const((N, H)),
        scratch_shapes=[
            pltpu.VMEM((N, H), jnp.float32),   # h_state (carried across layers)
            pltpu.VMEM((N, H), jnp.float32),   # agg accumulator
            pltpu.VMEM((N, H), jnp.float32),   # h @ We1_hr (per-layer)
            pltpu.VMEM((N, H), jnp.float32),   # h @ We1_hc (per-layer)
        ],
        compiler_params=pltpu.CompilerParams(
            dimension_semantics=("arbitrary", "arbitrary"),
            vmem_limit_bytes=48 * 1024 * 1024,
        ),
        cost_estimate=cost,
    )(h, x, node_mask, row_p, col_p, eattr_p, emask_p,
      We1_hr, We1_hc, We1_d, We1_e, params["be1"],
      params["We2"], params["be2"], params["Wa"], params["ba"],
      Wn1_h, Wn1_a, params["bn1"], params["Wn2"], params["bn2"])
    return out_h, x


def reference_forward(h, x, row, col, edge_attr_in, node_mask, edge_mask, params):
    """Pure-JAX mirror of the PyTorch EquivariantBlock forward."""
    N = h.shape[0]
    diff = x[row] - x[col]
    radial = jnp.sum(diff ** 2, axis=1, keepdims=True)
    ea = jnp.concatenate([radial, edge_attr_in], axis=1)
    for l in range(N_LAYERS):
        W1, b1 = params["We1"][l], params["be1"][l]
        W2, b2 = params["We2"][l], params["be2"][l]
        wa, ba = params["Wa"][l], params["ba"][l]
        Wn1, bn1 = params["Wn1"][l], params["bn1"][l]
        Wn2, bn2 = params["Wn2"][l], params["bn2"][l]
        inp = jnp.concatenate([h[row], h[col], ea], axis=1)
        m = jax.nn.silu(inp @ W1 + b1)
        m = jax.nn.silu(m @ W2 + b2)
        att = jax.nn.sigmoid(jnp.sum(m * wa, axis=1, keepdims=True) + ba)
        ef = m * att * edge_mask
        agg = jax.ops.segment_sum(ef, row, num_segments=N) / NORMALIZATION_FACTOR
        nin = jnp.concatenate([h, agg], axis=1)
        h = (h + jax.nn.silu(nin @ Wn1 + bn1) @ Wn2 + bn2) * node_mask
    return h * node_mask, x


if __name__ == "__main__":
    key = jax.random.PRNGKey(0)
    N, E, H = 8, 20, HIDDEN_NF
    k1, k2, k3, k4, k5, kp = jax.random.split(key, 6)

    h = jax.random.normal(k1, (N, H), jnp.float32)
    x = jax.random.normal(k2, (N, 3), jnp.float32)
    row = jax.random.randint(k3, (E,), 0, N)
    col = jax.random.randint(k4, (E,), 0, N)
    edge_attr = jax.random.normal(k5, (E, 1), jnp.float32)
    node_mask = jnp.ones((N, 1), jnp.float32).at[-1, 0].set(0.0)
    edge_mask = jnp.ones((E, 1), jnp.float32).at[-2:, 0].set(0.0)
    params = init_params(kp)

    # edge_tile=8 -> 3 edge tiles (incl. padded edges): exercises the grid,
    # the cross-tile agg accumulation and the edge-padding path.
    h_out, x_out = equivariant_block(h, x, row, col, edge_attr,
                                     node_mask, edge_mask, params, edge_tile=8)
    jax.block_until_ready((h_out, x_out))

    h_ref, x_ref_arr = reference_forward(h, x, row, col, edge_attr,
                                         node_mask, edge_mask, params)
    max_err = float(jnp.max(jnp.abs(h_out - h_ref)))
    assert jnp.allclose(h_out, h_ref, atol=1e-4, rtol=1e-4), max_err
    assert jnp.allclose(x_out, x), "x must pass through unchanged"
    print("KERNEL_OK")
</pallas_src>

<mosaic_0001>
module attributes {stable_mosaic.version = 11 : i64} {
  func.func @eq_block_kernel(%arg0: i32, %arg1: i32, %arg2: memref<8x32xf32, #tpu.memory_space<vmem>>, %arg3: memref<8x3xf32, #tpu.memory_space<vmem>>, %arg4: memref<8x1xf32, #tpu.memory_space<vmem>>, %arg5: memref<8x1xi32, #tpu.memory_space<vmem>>, %arg6: memref<8x1xi32, #tpu.memory_space<vmem>>, %arg7: memref<8x1xf32, #tpu.memory_space<vmem>>, %arg8: memref<8x1xf32, #tpu.memory_space<vmem>>, %arg9: memref<1x32x32xf32, #tpu.memory_space<vmem>>, %arg10: memref<1x32x32xf32, #tpu.memory_space<vmem>>, %arg11: memref<1x1x32xf32, #tpu.memory_space<vmem>>, %arg12: memref<1x1x32xf32, #tpu.memory_space<vmem>>, %arg13: memref<1x1x32xf32, #tpu.memory_space<vmem>>, %arg14: memref<1x32x32xf32, #tpu.memory_space<vmem>>, %arg15: memref<1x1x32xf32, #tpu.memory_space<vmem>>, %arg16: memref<1x1x32xf32, #tpu.memory_space<vmem>>, %arg17: memref<1x1x1xf32, #tpu.memory_space<vmem>>, %arg18: memref<1x32x32xf32, #tpu.memory_space<vmem>>, %arg19: memref<1x32x32xf32, #tpu.memory_space<vmem>>, %arg20: memref<1x1x32xf32, #tpu.memory_space<vmem>>, %arg21: memref<1x32x32xf32, #tpu.memory_space<vmem>>, %arg22: memref<1x1x32xf32, #tpu.memory_space<vmem>>, %arg23: memref<8x32xf32, #tpu.memory_space<vmem>>, %arg24: memref<8x32xf32, #tpu.memory_space<vmem>>, %arg25: memref<8x32xf32, #tpu.memory_space<vmem>>, %arg26: memref<8x32xf32, #tpu.memory_space<vmem>>, %arg27: memref<8x32xf32, #tpu.memory_space<vmem>>) attributes {dimension_semantics = [#tpu.dimension_semantics<arbitrary>, #tpu.dimension_semantics<arbitrary>], iteration_bounds = array<i64: 2, 3>, scalar_prefetch = 0 : i64, scratch_operands = 4 : i64, tpu.core_type = #tpu.core_type<tc>, window_params = [{pipeline_mode = #tpu.pipeline_mode<synchronous>, transform_indices = @transform_0, window_bounds = array<i64: 8, 32>}, {pipeline_mode = #tpu.pipeline_mode<synchronous>, transform_indices = @transform_1, window_bounds = array<i64: 8, 3>}, {pipeline_mode = #tpu.pipeline_mode<synchronous>, transform_indices = @transform_2, window_bounds = array<i64: 8, 1>}, {transform_indices = @transform_3, window_bounds = array<i64: 8, 1>}, {transform_indices = @transform_4, window_bounds = array<i64: 8, 1>}, {transform_indices = @transform_5, window_bounds = array<i64: 8, 1>}, {transform_indices = @transform_6, window_bounds = array<i64: 8, 1>}, {transform_indices = @transform_7, window_bounds = array<i64: 1, 32, 32>}, {transform_indices = @transform_8, window_bounds = array<i64: 1, 32, 32>}, {transform_indices = @transform_9, window_bounds = array<i64: 1, 1, 32>}, {transform_indices = @transform_10, window_bounds = array<i64: 1, 1, 32>}, {transform_indices = @transform_11, window_bounds = array<i64: 1, 1, 32>}, {transform_indices = @transform_12, window_bounds = array<i64: 1, 32, 32>}, {transform_indices = @transform_13, window_bounds = array<i64: 1, 1, 32>}, {transform_indices = @transform_14, window_bounds = array<i64: 1, 1, 32>}, {transform_indices = @transform_15, window_bounds = array<i64: 1, 1, 1>}, {transform_indices = @transform_16, window_bounds = array<i64: 1, 32, 32>}, {transform_indices = @transform_17, window_bounds = array<i64: 1, 32, 32>}, {transform_indices = @transform_18, window_bounds = array<i64: 1, 1, 32>}, {transform_indices = @transform_19, window_bounds = array<i64: 1, 32, 32>}, {transform_indices = @transform_20, window_bounds = array<i64: 1, 1, 32>}, {pipeline_mode = #tpu.pipeline_mode<synchronous>, transform_indices = @transform_21, window_bounds = array<i64: 8, 32>}]} {
    %c0_i32 = arith.constant 0 : i32
    %0 = arith.cmpi eq, %arg1, %c0_i32 : i32
    %1 = arith.extui %0 : i1 to i32
    %c0_i32_0 = arith.constant 0 : i32
    %2 = arith.cmpi ne, %1, %c0_i32_0 : i32
    scf.if %2 {
      %c0_i32_49 = arith.constant 0 : i32
      %88 = arith.cmpi eq, %arg0, %c0_i32_49 : i32
      %89 = arith.extui %88 : i1 to i32
      %c0_i32_50 = arith.constant 0 : i32
      %90 = arith.cmpi ne, %89, %c0_i32_50 : i32
      scf.if %90 {
        %c0_70 = arith.constant 0 : index
        %c0_71 = arith.constant 0 : index
        %103 = vector.load %arg2[%c0_70, %c0_71] : memref<8x32xf32, #tpu.memory_space<vmem>>, vector<8x32xf32>
        %c0_72 = arith.constant 0 : index
        %c0_73 = arith.constant 0 : index
        %104 = vector.load %arg24[%c0_72, %c0_73] : memref<8x32xf32, #tpu.memory_space<vmem>>, vector<8x32xf32>
        tpu.vector_store %arg24[%c0_72, %c0_73], %103 {strides = array<i32>} : memref<8x32xf32, #tpu.memory_space<vmem>>, vector<8x32xf32>,
      } else {
      }
      %cst_51 = arith.constant 0.000000e+00 : f32
      %91 = vector.broadcast %cst_51 : f32 to vector<8x32xf32>
      %c0_52 = arith.constant 0 : index
      %c0_53 = arith.constant 0 : index
      %92 = vector.load %arg25[%c0_52, %c0_53] : memref<8x32xf32, #tpu.memory_space<vmem>>, vector<8x32xf32>
      tpu.vector_store %arg25[%c0_52, %c0_53], %91 {strides = array<i32>} : memref<8x32xf32, #tpu.memory_space<vmem>>, vector<8x32xf32>,
      %c0_54 = arith.constant 0 : index
      %c0_55 = arith.constant 0 : index
      %93 = vector.load %arg24[%c0_54, %c0_55] : memref<8x32xf32, #tpu.memory_space<vmem>>, vector<8x32xf32>
      %c0_56 = arith.constant 0 : index
      %c0_57 = arith.constant 0 : index
      %c0_58 = arith.constant 0 : index
      %94 = vector.load %arg9[%c0_56, %c0_57, %c0_58] : memref<1x32x32xf32, #tpu.memory_space<vmem>>, vector<1x32x32xf32>
      %95 = vector.shape_cast %94 : vector<1x32x32xf32> to vector<32x32xf32>
      %cst_59 = arith.constant dense<0.000000e+00> : vector<8x32xf32>
      %96 = tpu.matmul %93, %95, %cst_59 {dimension_numbers = #tpu.dot_dimension_numbers<[1], [0], [0], [1], [0, 0, 1, 1], [], []>} : vector<8x32xf32>, vector<32x32xf32>, vector<8x32xf32> -> vector<8x32xf32>
      %c0_60 = arith.constant 0 : index
      %c0_61 = arith.constant 0 : index
      %97 = vector.load %arg26[%c0_60, %c0_61] : memref<8x32xf32, #tpu.memory_space<vmem>>, vector<8x32xf32>
      tpu.vector_store %arg26[%c0_60, %c0_61], %96 {strides = array<i32>} : memref<8x32xf32, #tpu.memory_space<vmem>>, vector<8x32xf32>,
      %c0_62 = arith.constant 0 : index
      %c0_63 = arith.constant 0 : index
      %98 = vector.load %arg24[%c0_62, %c0_63] : memref<8x32xf32, #tpu.memory_space<vmem>>, vector<8x32xf32>
      %c0_64 = arith.constant 0 : index
      %c0_65 = arith.constant 0 : index
      %c0_66 = arith.constant 0 : index
      %99 = vector.load %arg10[%c0_64, %c0_65, %c0_66] : memref<1x32x32xf32, #tpu.memory_space<vmem>>, vector<1x32x32xf32>
      %100 = vector.shape_cast %99 : vector<1x32x32xf32> to vector<32x32xf32>
      %cst_67 = arith.constant dense<0.000000e+00> : vector<8x32xf32>
      %101 = tpu.matmul %98, %100, %cst_67 {dimension_numbers = #tpu.dot_dimension_numbers<[1], [0], [0], [1], [0, 0, 1, 1], [], []>} : vector<8x32xf32>, vector<32x32xf32>, vector<8x32xf32> -> vector<8x32xf32>
      %c0_68 = arith.constant 0 : index
      %c0_69 = arith.constant 0 : index
      %102 = vector.load %arg27[%c0_68, %c0_69] : memref<8x32xf32, #tpu.memory_space<vmem>>, vector<8x32xf32>
      tpu.vector_store %arg27[%c0_68, %c0_69], %101 {strides = array<i32>} : memref<8x32xf32, #tpu.memory_space<vmem>>, vector<8x32xf32>,
    } else {
    }
    %c0 = arith.constant 0 : index
    %c0_1 = arith.constant 0 : index
    %3 = vector.load %arg5[%c0, %c0_1] : memref<8x1xi32, #tpu.memory_space<vmem>>, vector<8x1xi32>
    %c0_2 = arith.constant 0 : index
    %c0_3 = arith.constant 0 : index
    %4 = vector.load %arg6[%c0_2, %c0_3] : memref<8x1xi32, #tpu.memory_space<vmem>>, vector<8x1xi32>
    %5 = tpu.iota {dimensions = array<i32: 1>} : vector<8x8xi32>
    %6 = vector.broadcast %3 : vector<8x1xi32> to vector<8x8xi32>
    %7 = arith.cmpi eq, %5, %6 : vector<8x8xi32>
    %8 = arith.extui %7 : vector<8x8xi1> to vector<8x8xi32>
    %9 = arith.sitofp %8 : vector<8x8xi32> to vector<8x8xf32>
    %10 = vector.broadcast %4 : vector<8x1xi32> to vector<8x8xi32>
    %11 = arith.cmpi eq, %5, %10 : vector<8x8xi32>
    %12 = arith.extui %11 : vector<8x8xi1> to vector<8x8xi32>
    %13 = arith.sitofp %12 : vector<8x8xi32> to vector<8x8xf32>
    %14 = arith.subf %9, %13 : vector<8x8xf32>
    %c0_4 = arith.constant 0 : index
    %c0_5 = arith.constant 0 : index
    %15 = vector.load %arg3[%c0_4, %c0_5] : memref<8x3xf32, #tpu.memory_space<vmem>>, vector<8x3xf32>
    %cst = arith.constant dense<0.000000e+00> : vector<8x3xf32>
    %16 = tpu.matmul %14, %15, %cst {dimension_numbers = #tpu.dot_dimension_numbers<[1], [0], [0], [1], [0, 0, 1, 1], [], []>} : vector<8x8xf32>, vector<8x3xf32>, vector<8x3xf32> -> vector<8x3xf32>
    %17 = arith.mulf %16, %16 : vector<8x3xf32>
    %cst_6 = arith.constant dense<0.000000e+00> : vector<8xf32>
    %18 = vector.multi_reduction <add>, %17, %cst_6 [1] : vector<8x3xf32> to vector<8xf32>
    %19 = vector.shape_cast %18 : vector<8xf32> to vector<8x1xf32>
    %c0_7 = arith.constant 0 : index
    %c0_8 = arith.constant 0 : index
    %20 = vector.load %arg26[%c0_7, %c0_8] : memref<8x32xf32, #tpu.memory_space<vmem>>, vector<8x32xf32>
    %cst_9 = arith.constant dense<0.000000e+00> : vector<8x32xf32>
    %21 = tpu.matmul %9, %20, %cst_9 {dimension_numbers = #tpu.dot_dimension_numbers<[1], [0], [0], [1], [0, 0, 1, 1], [], []>} : vector<8x8xf32>, vector<8x32xf32>, vector<8x32xf32> -> vector<8x32xf32>
    %c0_10 = arith.constant 0 : index
    %c0_11 = arith.constant 0 : index
    %22 = vector.load %arg27[%c0_10, %c0_11] : memref<8x32xf32, #tpu.memory_space<vmem>>, vector<8x32xf32>
    %cst_12 = arith.constant dense<0.000000e+00> : vector<8x32xf32>
    %23 = tpu.matmul %13, %22, %cst_12 {dimension_numbers = #tpu.dot_dimension_numbers<[1], [0], [0], [1], [0, 0, 1, 1], [], []>} : vector<8x8xf32>, vector<8x32xf32>, vector<8x32xf32> -> vector<8x32xf32>
    %24 = arith.addf %21, %23 : vector<8x32xf32>
    %c0_13 = arith.constant 0 : index
    %c0_14 = arith.constant 0 : index
    %c0_15 = arith.constant 0 : index
    %25 = vector.load %arg11[%c0_13, %c0_14, %c0_15] : memref<1x1x32xf32, #tpu.memory_space<vmem>>, vector<1x1x32xf32>
    %26 = vector.shape_cast %25 : vector<1x1x32xf32> to vector<1x32xf32>
    %27 = vector.broadcast %19 : vector<8x1xf32> to vector<8x32xf32>
    %28 = vector.broadcast %26 : vector<1x32xf32> to vector<8x32xf32>
    %29 = arith.mulf %27, %28 : vector<8x32xf32>
    %30 = arith.addf %24, %29 : vector<8x32xf32>
    %c0_16 = arith.constant 0 : index
    %c0_17 = arith.constant 0 : index
    %31 = vector.load %arg7[%c0_16, %c0_17] : memref<8x1xf32, #tpu.memory_space<vmem>>, vector<8x1xf32>
    %c0_18 = arith.constant 0 : index
    %c0_19 = arith.constant 0 : index
    %c0_20 = arith.constant 0 : index
    %32 = vector.load %arg12[%c0_18, %c0_19, %c0_20] : memref<1x1x32xf32, #tpu.memory_space<vmem>>, vector<1x1x32xf32>
    %33 = vector.shape_cast %32 : vector<1x1x32xf32> to vector<1x32xf32>
    %34 = vector.broadcast %31 : vector<8x1xf32> to vector<8x32xf32>
    %35 = vector.broadcast %33 : vector<1x32xf32> to vector<8x32xf32>
    %36 = arith.mulf %34, %35 : vector<8x32xf32>
    %37 = arith.addf %30, %36 : vector<8x32xf32>
    %c0_21 = arith.constant 0 : index
    %c0_22 = arith.constant 0 : index
    %c0_23 = arith.constant 0 : index
    %38 = vector.load %arg13[%c0_21, %c0_22, %c0_23] : memref<1x1x32xf32, #tpu.memory_space<vmem>>, vector<1x1x32xf32>
    %39 = vector.shape_cast %38 : vector<1x1x32xf32> to vector<1x32xf32>
    %40 = vector.broadcast %39 : vector<1x32xf32> to vector<8x32xf32>
    %41 = arith.addf %37, %40 : vector<8x32xf32>
    %42 = arith.negf %41 : vector<8x32xf32>
    %43 = math.exp %42 : vector<8x32xf32>
    %cst_24 = arith.constant 1.000000e+00 : f32
    %44 = vector.broadcast %cst_24 : f32 to vector<8x32xf32>
    %45 = arith.addf %44, %43 : vector<8x32xf32>
    %46 = arith.divf %44, %45 : vector<8x32xf32>
    %47 = arith.mulf %41, %46 : vector<8x32xf32>
    %c0_25 = arith.constant 0 : index
    %c0_26 = arith.constant 0 : index
    %c0_27 = arith.constant 0 : index
    %48 = vector.load %arg14[%c0_25, %c0_26, %c0_27] : memref<1x32x32xf32, #tpu.memory_space<vmem>>, vector<1x32x32xf32>
    %49 = vector.shape_cast %48 : vector<1x32x32xf32> to vector<32x32xf32>
    %cst_28 = arith.constant dense<0.000000e+00> : vector<8x32xf32>
    %50 = tpu.matmul %47, %49, %cst_28 {dimension_numbers = #tpu.dot_dimension_numbers<[1], [0], [0], [1], [0, 0, 1, 1], [], []>} : vector<8x32xf32>, vector<32x32xf32>, vector<8x32xf32> -> vector<8x32xf32>
    %c0_29 = arith.constant 0 : index
    %c0_30 = arith.constant 0 : index
    %c0_31 = arith.constant 0 : index
    %51 = vector.load %arg15[%c0_29, %c0_30, %c0_31] : memref<1x1x32xf32, #tpu.memory_space<vmem>>, vector<1x1x32xf32>
    %52 = vector.shape_cast %51 : vector<1x1x32xf32> to vector<1x32xf32>
    %53 = vector.broadcast %52 : vector<1x32xf32> to vector<8x32xf32>
    %54 = arith.addf %50, %53 : vector<8x32xf32>
    %55 = arith.negf %54 : vector<8x32xf32>
    %56 = math.exp %55 : vector<8x32xf32>
    %cst_32 = arith.constant 1.000000e+00 : f32
    %57 = vector.broadcast %cst_32 : f32 to vector<8x32xf32>
    %58 = arith.addf %57, %56 : vector<8x32xf32>
    %59 = arith.divf %57, %58 : vector<8x32xf32>
    %60 = arith.mulf %54, %59 : vector<8x32xf32>
    %c0_33 = arith.constant 0 : index
    %c0_34 = arith.constant 0 : index
    %c0_35 = arith.constant 0 : index
    %61 = vector.load %arg16[%c0_33, %c0_34, %c0_35] : memref<1x1x32xf32, #tpu.memory_space<vmem>>, vector<1x1x32xf32>
    %62 = vector.shape_cast %61 : vector<1x1x32xf32> to vector<1x32xf32>
    %63 = vector.broadcast %62 : vector<1x32xf32> to vector<8x32xf32>
    %64 = arith.mulf %60, %63 : vector<8x32xf32>
    %cst_36 = arith.constant dense<0.000000e+00> : vector<8xf32>
    %65 = vector.multi_reduction <add>, %64, %cst_36 [1] : vector<8x32xf32> to vector<8xf32>
    %66 = vector.shape_cast %65 : vector<8xf32> to vector<8x1xf32>
    %c0_37 = arith.constant 0 : index
    %c0_38 = arith.constant 0 : index
    %c0_39 = arith.constant 0 : index
    %67 = vector.load %arg17[%c0_37, %c0_38, %c0_39] : memref<1x1x1xf32, #tpu.memory_space<vmem>>, vector<1x1x1xf32>
    %68 = vector.shape_cast %67 : vector<1x1x1xf32> to vector<1x1xf32>
    %69 = vector.broadcast %68 : vector<1x1xf32> to vector<8x1xf32>
    %70 = arith.addf %66, %69 : vector<8x1xf32>
    %71 = arith.negf %70 : vector<8x1xf32>
    %72 = math.exp %71 : vector<8x1xf32>
    %cst_40 = arith.constant 1.000000e+00 : f32
    %73 = vector.broadcast %cst_40 : f32 to vector<8x1xf32>
    %74 = arith.addf %73, %72 : vector<8x1xf32>
    %75 = arith.divf %73, %74 : vector<8x1xf32>
    %76 = vector.broadcast %75 : vector<8x1xf32> to vector<8x32xf32>
    %77 = arith.mulf %60, %76 : vector<8x32xf32>
    %c0_41 = arith.constant 0 : index
    %c0_42 = arith.constant 0 : index
    %78 = vector.load %arg8[%c0_41, %c0_42] : memref<8x1xf32, #tpu.memory_space<vmem>>, vector<8x1xf32>
    %79 = vector.broadcast %78 : vector<8x1xf32> to vector<8x32xf32>
    %80 = arith.mulf %77, %79 : vector<8x32xf32>
    %c0_43 = arith.constant 0 : index
    %c0_44 = arith.constant 0 : index
    %81 = vector.load %arg25[%c0_43, %c0_44] : memref<8x32xf32, #tpu.memory_space<vmem>>, vector<8x32xf32>
    %cst_45 = arith.constant dense<0.000000e+00> : vector<8x32xf32>
    %82 = tpu.matmul %9, %80, %cst_45 {dimension_numbers = #tpu.dot_dimension_numbers<[0], [0], [1], [1], [0, 1, 1, 1], [], []>} : vector<8x8xf32>, vector<8x32xf32>, vector<8x32xf32> -> vector<8x32xf32>
    %83 = arith.addf %81, %82 : vector<8x32xf32>
    %c0_46 = arith.constant 0 : index
    %c0_47 = arith.constant 0 : index
    %84 = vector.load %arg25[%c0_46, %c0_47] : memref<8x32xf32, #tpu.memory_space<vmem>>, vector<8x32xf32>
    tpu.vector_store %arg25[%c0_46, %c0_47], %83 {strides = array<i32>} : memref<8x32xf32, #tpu.memory_space<vmem>>, vector<8x32xf32>,
    %c2_i32 = arith.constant 2 : i32
    %85 = arith.cmpi eq, %arg1, %c2_i32 : i32
    %86 = arith.extui %85 : i1 to i32
    %c0_i32_48 = arith.constant 0 : i32
    %87 = arith.cmpi ne, %86, %c0_i32_48 : i32
    scf.if %87 {
      %c0_49 = arith.constant 0 : index
      %c0_50 = arith.constant 0 : index
      %88 = vector.load %arg4[%c0_49, %c0_50] : memref<8x1xf32, #tpu.memory_space<vmem>>, vector<8x1xf32>
      %c0_51 = arith.constant 0 : index
      %c0_52 = arith.constant 0 : index
      %89 = vector.load %arg24[%c0_51, %c0_52] : memref<8x32xf32, #tpu.memory_space<vmem>>, vector<8x32xf32>
      %c0_53 = arith.constant 0 : index
      %c0_54 = arith.constant 0 : index
      %c0_55 = arith.constant 0 : index
      %90 = vector.load %arg18[%c0_53, %c0_54, %c0_55] : memref<1x32x32xf32, #tpu.memory_space<vmem>>, vector<1x32x32xf32>
      %91 = vector.shape_cast %90 : vector<1x32x32xf32> to vector<32x32xf32>
      %cst_56 = arith.constant dense<0.000000e+00> : vector<8x32xf32>
      %92 = tpu.matmul %89, %91, %cst_56 {dimension_numbers = #tpu.dot_dimension_numbers<[1], [0], [0], [1], [0, 0, 1, 1], [], []>} : vector<8x32xf32>, vector<32x32xf32>, vector<8x32xf32> -> vector<8x32xf32>
      %c0_57 = arith.constant 0 : index
      %c0_58 = arith.constant 0 : index
      %93 = vector.load %arg25[%c0_57, %c0_58] : memref<8x32xf32, #tpu.memory_space<vmem>>, vector<8x32xf32>
      %c0_59 = arith.constant 0 : index
      %c0_60 = arith.constant 0 : index
      %c0_61 = arith.constant 0 : index
      %94 = vector.load %arg19[%c0_59, %c0_60, %c0_61] : memref<1x32x32xf32, #tpu.memory_space<vmem>>, vector<1x32x32xf32>
      %95 = vector.shape_cast %94 : vector<1x32x32xf32> to vector<32x32xf32>
      %cst_62 = arith.constant dense<0.000000e+00> : vector<8x32xf32>
      %96 = tpu.matmul %93, %95, %cst_62 {dimension_numbers = #tpu.dot_dimension_numbers<[1], [0], [0], [1], [0, 0, 1, 1], [], []>} : vector<8x32xf32>, vector<32x32xf32>, vector<8x32xf32> -> vector<8x32xf32>
      %97 = arith.addf %92, %96 : vector<8x32xf32>
      %c0_63 = arith.constant 0 : index
      %c0_64 = arith.constant 0 : index
      %c0_65 = arith.constant 0 : index
      %98 = vector.load %arg20[%c0_63, %c0_64, %c0_65] : memref<1x1x32xf32, #tpu.memory_space<vmem>>, vector<1x1x32xf32>
      %99 = vector.shape_cast %98 : vector<1x1x32xf32> to vector<1x32xf32>
      %100 = vector.broadcast %99 : vector<1x32xf32> to vector<8x32xf32>
      %101 = arith.addf %97, %100 : vector<8x32xf32>
      %c0_66 = arith.constant 0 : index
      %c0_67 = arith.constant 0 : index
      %102 = vector.load %arg24[%c0_66, %c0_67] : memref<8x32xf32, #tpu.memory_space<vmem>>, vector<8x32xf32>
      %103 = arith.negf %101 : vector<8x32xf32>
      %104 = math.exp %103 : vector<8x32xf32>
      %cst_68 = arith.constant 1.000000e+00 : f32
      %105 = vector.broadcast %cst_68 : f32 to vector<8x32xf32>
      %106 = arith.addf %105, %104 : vector<8x32xf32>
      %107 = arith.divf %105, %106 : vector<8x32xf32>
      %108 = arith.mulf %101, %107 : vector<8x32xf32>
      %c0_69 = arith.constant 0 : index
      %c0_70 = arith.constant 0 : index
      %c0_71 = arith.constant 0 : index
      %109 = vector.load %arg21[%c0_69, %c0_70, %c0_71] : memref<1x32x32xf32, #tpu.memory_space<vmem>>, vector<1x32x32xf32>
      %110 = vector.shape_cast %109 : vector<1x32x32xf32> to vector<32x32xf32>
      %cst_72 = arith.constant dense<0.000000e+00> : vector<8x32xf32>
      %111 = tpu.matmul %108, %110, %cst_72 {dimension_numbers = #tpu.dot_dimension_numbers<[1], [0], [0], [1], [0, 0, 1, 1], [], []>} : vector<8x32xf32>, vector<32x32xf32>, vector<8x32xf32> -> vector<8x32xf32>
      %112 = arith.addf %102, %111 : vector<8x32xf32>
      %c0_73 = arith.constant 0 : index
      %c0_74 = arith.constant 0 : index
      %c0_75 = arith.constant 0 : index
      %113 = vector.load %arg22[%c0_73, %c0_74, %c0_75] : memref<1x1x32xf32, #tpu.memory_space<vmem>>, vector<1x1x32xf32>
      %114 = vector.shape_cast %113 : vector<1x1x32xf32> to vector<1x32xf32>
      %115 = vector.broadcast %114 : vector<1x32xf32> to vector<8x32xf32>
      %116 = arith.addf %112, %115 : vector<8x32xf32>
      %117 = vector.broadcast %88 : vector<8x1xf32> to vector<8x32xf32>
      %118 = arith.mulf %116, %117 : vector<8x32xf32>
      %c0_76 = arith.constant 0 : index
      %c0_77 = arith.constant 0 : index
      %119 = vector.load %arg24[%c0_76, %c0_77] : memref<8x32xf32, #tpu.memory_space<vmem>>, vector<8x32xf32>
      tpu.vector_store %arg24[%c0_76, %c0_77], %118 {strides = array<i32>} : memref<8x32xf32, #tpu.memory_space<vmem>>, vector<8x32xf32>,
      %c1_i32 = arith.constant 1 : i32
      %120 = arith.cmpi eq, %arg0, %c1_i32 : i32
      %121 = arith.extui %120 : i1 to i32
      %c0_i32_78 = arith.constant 0 : i32
      %122 = arith.cmpi ne, %121, %c0_i32_78 : i32
      scf.if %122 {
        %123 = vector.broadcast %88 : vector<8x1xf32> to vector<8x32xf32>
        %124 = arith.mulf %118, %123 : vector<8x32xf32>
        %c0_79 = arith.constant 0 : index
        %c0_80 = arith.constant 0 : index
        %125 = vector.load %arg23[%c0_79, %c0_80] : memref<8x32xf32, #tpu.memory_space<vmem>>, vector<8x32xf32>
        tpu.vector_store %arg23[%c0_79, %c0_80], %124 {strides = array<i32>} : memref<8x32xf32, #tpu.memory_space<vmem>>, vector<8x32xf32>,
      } else {
      }
    } else {
    }
    return
  }
  func.func @transform_0(%arg0: i32, %arg1: i32) -> (i32, i32) {
    %c0_i32 = arith.constant 0 : i32
    %c0_i32_0 = arith.constant 0 : i32
    %c0_i32_1 = arith.constant 0 : i32
    return %c0_i32, %c0_i32_0 : i32, i32
  }
  func.func @transform_1(%arg0: i32, %arg1: i32) -> (i32, i32) {
    %c0_i32 = arith.constant 0 : i32
    %c0_i32_0 = arith.constant 0 : i32
    %c0_i32_1 = arith.constant 0 : i32
    return %c0_i32, %c0_i32_0 : i32, i32
  }
  func.func @transform_2(%arg0: i32, %arg1: i32) -> (i32, i32) {
    %c0_i32 = arith.constant 0 : i32
    %c0_i32_0 = arith.constant 0 : i32
    %c0_i32_1 = arith.constant 0 : i32
    return %c0_i32, %c0_i32_0 : i32, i32
  }
  func.func @transform_3(%arg0: i32, %arg1: i32) -> (i32, i32) {
    %c0_i32 = arith.constant 0 : i32
    %c0_i32_0 = arith.constant 0 : i32
    return %arg1, %c0_i32 : i32, i32
  }
  func.func @transform_4(%arg0: i32, %arg1: i32) -> (i32, i32) {
    %c0_i32 = arith.constant 0 : i32
    %c0_i32_0 = arith.constant 0 : i32
    return %arg1, %c0_i32 : i32, i32
  }
  func.func @transform_5(%arg0: i32, %arg1: i32) -> (i32, i32) {
    %c0_i32 = arith.constant 0 : i32
    %c0_i32_0 = arith.constant 0 : i32
    return %arg1, %c0_i32 : i32, i32
  }
  func.func @transform_6(%arg0: i32, %arg1: i32) -> (i32, i32) {
    %c0_i32 = arith.constant 0 : i32
    %c0_i32_0 = arith.constant 0 : i32
    return %arg1, %c0_i32 : i32, i32
  }
  func.func @transform_7(%arg0: i32, %arg1: i32) -> (i32, i32, i32) {
    %c0_i32 = arith.constant 0 : i32
    %c0_i32_0 = arith.constant 0 : i32
    %c0_i32_1 = arith.constant 0 : i32
    return %arg0, %c0_i32, %c0_i32_0 : i32, i32, i32
  }
  func.func @transform_8(%arg0: i32, %arg1: i32) -> (i32, i32, i32) {
    %c0_i32 = arith.constant 0 : i32
    %c0_i32_0 = arith.constant 0 : i32
    %c0_i32_1 = arith.constant 0 : i32
    return %arg0, %c0_i32, %c0_i32_0 : i32, i32, i32
  }
  func.func @transform_9(%arg0: i32, %arg1: i32) -> (i32, i32, i32) {
    %c0_i32 = arith.constant 0 : i32
    %c0_i32_0 = arith.constant 0 : i32
    %c0_i32_1 = arith.constant 0 : i32
    return %arg0, %c0_i32, %c0_i32_0 : i32, i32, i32
  }
  func.func @transform_10(%arg0: i32, %arg1: i32) -> (i32, i32, i32) {
    %c0_i32 = arith.constant 0 : i32
    %c0_i32_0 = arith.constant 0 : i32
    %c0_i32_1 = arith.constant 0 : i32
    return %arg0, %c0_i32, %c0_i32_0 : i32, i32, i32
  }
  func.func @transform_11(%arg0: i32, %arg1: i32) -> (i32, i32, i32) {
    %c0_i32 = arith.constant 0 : i32
    %c0_i32_0 = arith.constant 0 : i32
    %c0_i32_1 = arith.constant 0 : i32
    return %arg0, %c0_i32, %c0_i32_0 : i32, i32, i32
  }
  func.func @transform_12(%arg0: i32, %arg1: i32) -> (i32, i32, i32) {
    %c0_i32 = arith.constant 0 : i32
    %c0_i32_0 = arith.constant 0 : i32
    %c0_i32_1 = arith.constant 0 : i32
    return %arg0, %c0_i32, %c0_i32_0 : i32, i32, i32
  }
  func.func @transform_13(%arg0: i32, %arg1: i32) -> (i32, i32, i32) {
    %c0_i32 = arith.constant 0 : i32
    %c0_i32_0 = arith.constant 0 : i32
    %c0_i32_1 = arith.constant 0 : i32
    return %arg0, %c0_i32, %c0_i32_0 : i32, i32, i32
  }
  func.func @transform_14(%arg0: i32, %arg1: i32) -> (i32, i32, i32) {
    %c0_i32 = arith.constant 0 : i32
    %c0_i32_0 = arith.constant 0 : i32
    %c0_i32_1 = arith.constant 0 : i32
    return %arg0, %c0_i32, %c0_i32_0 : i32, i32, i32
  }
  func.func @transform_15(%arg0: i32, %arg1: i32) -> (i32, i32, i32) {
    %c0_i32 = arith.constant 0 : i32
    %c0_i32_0 = arith.constant 0 : i32
    %c0_i32_1 = arith.constant 0 : i32
    return %arg0, %c0_i32, %c0_i32_0 : i32, i32, i32
  }
  func.func @transform_16(%arg0: i32, %arg1: i32) -> (i32, i32, i32) {
    %c0_i32 = arith.constant 0 : i32
    %c0_i32_0 = arith.constant 0 : i32
    %c0_i32_1 = arith.constant 0 : i32
    return %arg0, %c0_i32, %c0_i32_0 : i32, i32, i32
  }
  func.func @transform_17(%arg0: i32, %arg1: i32) -> (i32, i32, i32) {
    %c0_i32 = arith.constant 0 : i32
    %c0_i32_0 = arith.constant 0 : i32
    %c0_i32_1 = arith.constant 0 : i32
    return %arg0, %c0_i32, %c0_i32_0 : i32, i32, i32
  }
  func.func @transform_18(%arg0: i32, %arg1: i32) -> (i32, i32, i32) {
    %c0_i32 = arith.constant 0 : i32
    %c0_i32_0 = arith.constant 0 : i32
    %c0_i32_1 = arith.constant 0 : i32
    return %arg0, %c0_i32, %c0_i32_0 : i32, i32, i32
  }
  func.func @transform_19(%arg0: i32, %arg1: i32) -> (i32, i32, i32) {
    %c0_i32 = arith.constant 0 : i32
    %c0_i32_0 = arith.constant 0 : i32
    %c0_i32_1 = arith.constant 0 : i32
    return %arg0, %c0_i32, %c0_i32_0 : i32, i32, i32
  }
  func.func @transform_20(%arg0: i32, %arg1: i32) -> (i32, i32, i32) {
    %c0_i32 = arith.constant 0 : i32
    %c0_i32_0 = arith.constant 0 : i32
    %c0_i32_1 = arith.constant 0 : i32
    return %arg0, %c0_i32, %c0_i32_0 : i32, i32, i32
  }
  func.func @transform_21(%arg0: i32, %arg1: i32) -> (i32, i32) {
    %c0_i32 = arith.constant 0 : i32
    %c0_i32_0 = arith.constant 0 : i32
    %c0_i32_1 = arith.constant 0 : i32
    return %c0_i32, %c0_i32_0 : i32, i32
  }
}

</mosaic_0001>

<llo_original>
// kernel: equivariant_block.1
$region0: #{equivariant_block.1}
  #allocation0 [shape = 'u32[]', space=smem, size = 0x4, offset = 0x4, fixed_abs, tag = 'smem constant byte address 0x4 - core index']
  #allocation1 [shape = 'u32[144,128]{1,0:T(1,128)}', space=vmem, size = 0x12000, scoped, tag = 'internal scratch']
  #allocation2 [shape = 'f32[8,32]{1,0:T(8,128)}', space=vmem, size = 0x1000, scoped, tag = 'scratch operand']
  #allocation3 [shape = 'f32[8,32]{1,0:T(8,128)}', space=vmem, size = 0x1000, scoped, tag = 'scratch operand']
  #allocation4 [shape = 'f32[8,32]{1,0:T(8,128)}', space=vmem, size = 0x1000, scoped, tag = 'scratch operand']
  #allocation5 [shape = 'f32[8,32]{1,0:T(8,128)}', space=vmem, size = 0x1000, scoped, tag = 'scratch operand']
  %s0 = inlined_call_operand.vmem [shape: f32[8,32], index: 0, kind: input, shape index: {}]
  %s1 = inlined_call_operand.vmem [shape: f32[8,3], index: 1, kind: input, shape index: {}]
  %s2 = inlined_call_operand.vmem [shape: f32[8,1], index: 2, kind: input, shape index: {}]
  %s3 = inlined_call_operand.vmem [shape: s32[24,1], index: 3, kind: input, shape index: {}]
  %s4 = inlined_call_operand.vmem [shape: s32[24,1], index: 4, kind: input, shape index: {}]
  %s5 = inlined_call_operand.vmem [shape: f32[24,1], index: 5, kind: input, shape index: {}]
  %s6 = inlined_call_operand.vmem [shape: f32[24,1], index: 6, kind: input, shape index: {}]
  %s7 = inlined_call_operand.vmem [shape: f32[2,32,32], index: 7, kind: input, shape index: {}]
  %s8 = inlined_call_operand.vmem [shape: f32[2,32,32], index: 8, kind: input, shape index: {}]
  %s9 = inlined_call_operand.vmem [shape: f32[2,1,32], index: 9, kind: input, shape index: {}]
  %s10 = inlined_call_operand.vmem [shape: f32[2,1,32], index: 10, kind: input, shape index: {}]
  %s11 = inlined_call_operand.vmem [shape: f32[2,1,32], index: 11, kind: input, shape index: {}]
  %s12 = inlined_call_operand.vmem [shape: f32[2,32,32], index: 12, kind: input, shape index: {}]
  %s13 = inlined_call_operand.vmem [shape: f32[2,1,32], index: 13, kind: input, shape index: {}]
  %s14 = inlined_call_operand.vmem [shape: f32[2,1,32], index: 14, kind: input, shape index: {}]
  %s15 = inlined_call_operand.vmem [shape: f32[2,1,1], index: 15, kind: input, shape index: {}]
  %s16 = inlined_call_operand.vmem [shape: f32[2,32,32], index: 16, kind: input, shape index: {}]
  %s17 = inlined_call_operand.vmem [shape: f32[2,32,32], index: 17, kind: input, shape index: {}]
  %s18 = inlined_call_operand.vmem [shape: f32[2,1,32], index: 18, kind: input, shape index: {}]
  %s19 = inlined_call_operand.vmem [shape: f32[2,32,32], index: 19, kind: input, shape index: {}]
  %s20 = inlined_call_operand.vmem [shape: f32[2,1,32], index: 20, kind: input, shape index: {}]
  %s21 = inlined_call_operand.hbm [shape: f32[8,32], index: 21, kind: output, shape index: {}]
  %s22 = sld [smem:[#allocation0]]
  $region133: #{equivariant_block.1} parent=0
    _
  %s24 = ssub.s32 1, %s22
  %s25 = scalar_select 0, %s24, %s22
  $region1: #{equivariant_block.1} parent=0
    #allocation6 [shape = 'u8[4096]{0}', space=vmem, size = 0x1000, scoped, tag = 'output window, operand 0, single buffered']
    #allocation7 [shape = 's32[2]{0}', space=sflag, size = 0x8, scoped, tag = 'scoped memory for equivariant_block.1']
    %26 = vsyncpa [#allocation7], 0
    loop: start=0, step=1, limit=8
    $region2: #{equivariant_block.1} parent=1 // loop_pre_header
      _
    $region3: #{equivariant_block.1} parent=1 // loop_header
      %s28 = sphi 0, %s32
      %p29 = scmp.ge.s32.totalorder %s28, 8
      %s35 = sphi 0, %s47
      %s36 = sphi 0, %s43
      %s37 = sphi 0, %s35
      %s38 = sphi 0, %s36
      %s39 = sphi 0, %s37
      %s40 = sphi 0, %s38
      %s48 = sphi 0, %s48
      %s50 = sphi 0, %s48
      %s51 = sphi 0, %s50
      %s65 = sphi 0, %s51
      %s69 = sphi 0, %s69
      %s71 = sphi 0, %s69
      %s72 = sphi 0, %s71
      %s86 = sphi 0, %s72
      %s90 = sphi 0, %s90
      %s92 = sphi 0, %s90
      %s93 = sphi 0, %s92
      %s107 = sphi 0, %s93
      %s113 = sphi 0, %s115
      %s116 = sphi 0, %s113
      %s117 = sphi 0, %s116
      %s133 = sphi 0, %s117
      %s139 = sphi 0, %s141
      %s142 = sphi 0, %s139
      %s143 = sphi 0, %s142
      %s159 = sphi 0, %s143
      %s165 = sphi 0, %s167
      %s168 = sphi 0, %s165
      %s169 = sphi 0, %s168
      %s185 = sphi 0, %s169
      %s191 = sphi 0, %s193
      %s194 = sphi 0, %s191
      %s195 = sphi 0, %s194
      %s211 = sphi 0, %s195
      %s217 = sphi 0, %s219
      %s220 = sphi 0, %s217
      %s221 = sphi 0, %s220
      %s237 = sphi 0, %s221
      %s243 = sphi 0, %s245
      %s246 = sphi 0, %s243
      %s247 = sphi 0, %s246
      %s263 = sphi 0, %s247
      %s269 = sphi 0, %s271
      %s272 = sphi 0, %s269
      %s273 = sphi 0, %s272
      %s289 = sphi 0, %s273
      %s295 = sphi 0, %s297
      %s298 = sphi 0, %s295
      %s299 = sphi 0, %s298
      %s315 = sphi 0, %s299
      %s321 = sphi 0, %s323
      %s324 = sphi 0, %s321
      %s325 = sphi 0, %s324
      %s341 = sphi 0, %s325
      %s347 = sphi 0, %s349
      %s350 = sphi 0, %s347
      %s351 = sphi 0, %s350
      %s367 = sphi 0, %s351
      %s373 = sphi 0, %s375
      %s376 = sphi 0, %s373
      %s377 = sphi 0, %s376
      %s393 = sphi 0, %s377
      %s399 = sphi 0, %s401
      %s402 = sphi 0, %s399
      %s403 = sphi 0, %s402
      %s419 = sphi 0, %s403
      %s425 = sphi 0, %s427
      %s428 = sphi 0, %s425
      %s429 = sphi 0, %s428
      %s445 = sphi 0, %s429
      %s451 = sphi 0, %s453
      %s454 = sphi 0, %s451
      %s455 = sphi 0, %s454
      %s471 = sphi 0, %s455
      %s477 = sphi 0, %s479
      %s480 = sphi 0, %s477
      %s481 = sphi 0, %s480
      %s497 = sphi 0, %s481
      %s503 = sphi 0, %s505
      %s506 = sphi 0, %s503
      %s507 = sphi 0, %s506
      %s523 = sphi 0, %s507
      %s529 = sphi 0, %s531
      %s532 = sphi 0, %s529
      %s533 = sphi 0, %s532
      %s549 = sphi 0, %s533
      %s555 = sphi 0, %s557
      %s558 = sphi 0, %s555
      %s559 = sphi 0, %s558
      %s575 = sphi 0, %s559
      %s579 = sphi 0, %s579
      %s581 = sphi 0, %s579
      %s582 = sphi 0, %s581
      %s596 = sphi 0, %s582
    $region4: #{equivariant_block.1} parent=1 // loop_header_branch
      %31 = sbr.rel (%p29) target = $region8
    $region5: #{equivariant_block.1} parent=1 // loop_body
      %s33 = ssub.s32 %s28, 1
      %s34 = ssub.s32 %s28, 2
      %s41 = sadd.s32 1, %s36
      %p42 = scmp.ge.s32.totalorder %s41, 3
      %s43 = scalar_select %p42, 0, %s41
      %s44 = sadd.s32 1, %s35
      %s45 = scalar_select %p42, %s44, %s35
      %p46 = scmp.ge.s32.totalorder %s45, 2
      %s47 = scalar_select %p46, 0, %s45
      %s49 = sadd.s32 %s48, 1
      %p52 = scmp.eq.s32.totalorder %s28, 5
      %p53 = scmp.ne.s32.totalorder %s48, %s50
      %p54 = scmp.eq.s32.totalorder %s28, 0
      %p55 = por %p53, %p54
      %p56 = scmp.ne.s32.totalorder %s48, %s50
      %p57 = scmp.eq.s32.totalorder %s33, 5
      %p58 = por %p56, %p57
      %p59 = scmp.ne.s32.totalorder %s50, %s51
      %p60 = scmp.eq.s32.totalorder %s33, 0
      %p61 = por %p59, %p60
      %p62 = scmp.ne.s32.totalorder %s50, %s51
      %p63 = scmp.eq.s32.totalorder %s34, 5
      %p64 = por %p62, %p63
      %p66 = scmp.ne.s32.totalorder %s51, %s65
      %p67 = scmp.eq.s32.totalorder %s34, 0
      %p68 = por %p66, %p67
      %s70 = sadd.s32 %s69, 1
      %p73 = scmp.eq.s32.totalorder %s28, 5
      %p74 = scmp.ne.s32.totalorder %s69, %s71
      %p75 = scmp.eq.s32.totalorder %s28, 0
      %p76 = por %p74, %p75
      %p77 = scmp.ne.s32.totalorder %s69, %s71
      %p78 = scmp.eq.s32.totalorder %s33, 5
      %p79 = por %p77, %p78
      %p80 = scmp.ne.s32.totalorder %s71, %s72
      %p81 = scmp.eq.s32.totalorder %s33, 0
      %p82 = por %p80, %p81
      %p83 = scmp.ne.s32.totalorder %s71, %s72
      %p84 = scmp.eq.s32.totalorder %s34, 5
      %p85 = por %p83, %p84
      %p87 = scmp.ne.s32.totalorder %s72, %s86
      %p88 = scmp.eq.s32.totalorder %s34, 0
      %p89 = por %p87, %p88
      %s91 = sadd.s32 %s90, 1
      %p94 = scmp.eq.s32.totalorder %s28, 5
      %p95 = scmp.ne.s32.totalorder %s90, %s92
      %p96 = scmp.eq.s32.totalorder %s28, 0
      %p97 = por %p95, %p96
      %p98 = scmp.ne.s32.totalorder %s90, %s92
      %p99 = scmp.eq.s32.totalorder %s33, 5
      %p100 = por %p98, %p99
      %p101 = scmp.ne.s32.totalorder %s92, %s93
      %p102 = scmp.eq.s32.totalorder %s33, 0
      %p103 = por %p101, %p102
      %p104 = scmp.ne.s32.totalorder %s92, %s93
      %p105 = scmp.eq.s32.totalorder %s34, 5
      %p106 = por %p104, %p105
      %p108 = scmp.ne.s32.totalorder %s93, %s107
      %p109 = scmp.eq.s32.totalorder %s34, 0
      %p110 = por %p108, %p109
      %s111 = ssub.s32 %s36, %s43
      %p112 = scmp.eq.s32.totalorder %s111, 0
      %s114 = sadd.s32 %s113, 1
      %s115 = scalar_select %p112, %s113, %s114
      %p118 = pneg %p112
      %p119 = scmp.eq.s32.totalorder %s28, 5
      %p120 = por %p118, %p119
      %p121 = scmp.ne.s32.totalorder %s113, %s116
      %p122 = scmp.eq.s32.totalorder %s28, 0
      %p123 = por %p121, %p122
      %p124 = scmp.ne.s32.totalorder %s113, %s116
      %p125 = scmp.eq.s32.totalorder %s33, 5
      %p126 = por %p124, %p125
      %p127 = scmp.ne.s32.totalorder %s116, %s117
      %p128 = scmp.eq.s32.totalorder %s33, 0
      %p129 = por %p127, %p128
      %p130 = scmp.ne.s32.totalorder %s116, %s117
      %p131 = scmp.eq.s32.totalorder %s34, 5
      %p132 = por %p130, %p131
      %p134 = scmp.ne.s32.totalorder %s117, %s133
      %p135 = scmp.eq.s32.totalorder %s34, 0
      %p136 = por %p134, %p135
      %s137 = ssub.s32 %s36, %s43
      %p138 = scmp.eq.s32.totalorder %s137, 0
      %s140 = sadd.s32 %s139, 1
      %s141 = scalar_select %p138, %s139, %s140
      %p144 = pneg %p138
      %p145 = scmp.eq.s32.totalorder %s28, 5
      %p146 = por %p144, %p145
      %p147 = scmp.ne.s32.totalorder %s139, %s142
      %p148 = scmp.eq.s32.totalorder %s28, 0
      %p149 = por %p147, %p148
      %p150 = scmp.ne.s32.totalorder %s139, %s142
      %p151 = scmp.eq.s32.totalorder %s33, 5
      %p152 = por %p150, %p151
      %p153 = scmp.ne.s32.totalorder %s142, %s143
      %p154 = scmp.eq.s32.totalorder %s33, 0
      %p155 = por %p153, %p154
      %p156 = scmp.ne.s32.totalorder %s142, %s143
      %p157 = scmp.eq.s32.totalorder %s34, 5
      %p158 = por %p156, %p157
      %p160 = scmp.ne.s32.totalorder %s143, %s159
      %p161 = scmp.eq.s32.totalorder %s34, 0
      %p162 = por %p160, %p161
      %s163 = ssub.s32 %s36, %s43
      %p164 = scmp.eq.s32.totalorder %s163, 0
      %s166 = sadd.s32 %s165, 1
      %s167 = scalar_select %p164, %s165, %s166
      %p170 = pneg %p164
      %p171 = scmp.eq.s32.totalorder %s28, 5
      %p172 = por %p170, %p171
      %p173 = scmp.ne.s32.totalorder %s165, %s168
      %p174 = scmp.eq.s32.totalorder %s28, 0
      %p175 = por %p173, %p174
      %p176 = scmp.ne.s32.totalorder %s165, %s168
      %p177 = scmp.eq.s32.totalorder %s33, 5
      %p178 = por %p176, %p177
      %p179 = scmp.ne.s32.totalorder %s168, %s169
      %p180 = scmp.eq.s32.totalorder %s33, 0
      %p181 = por %p179, %p180
      %p182 = scmp.ne.s32.totalorder %s168, %s169
      %p183 = scmp.eq.s32.totalorder %s34, 5
      %p184 = por %p182, %p183
      %p186 = scmp.ne.s32.totalorder %s169, %s185
      %p187 = scmp.eq.s32.totalorder %s34, 0
      %p188 = por %p186, %p187
      %s189 = ssub.s32 %s36, %s43
      %p190 = scmp.eq.s32.totalorder %s189, 0
      %s192 = sadd.s32 %s191, 1
      %s193 = scalar_select %p190, %s191, %s192
      %p196 = pneg %p190
      %p197 = scmp.eq.s32.totalorder %s28, 5
      %p198 = por %p196, %p197
      %p199 = scmp.ne.s32.totalorder %s191, %s194
      %p200 = scmp.eq.s32.totalorder %s28, 0
      %p201 = por %p199, %p200
      %p202 = scmp.ne.s32.totalorder %s191, %s194
      %p203 = scmp.eq.s32.totalorder %s33, 5
      %p204 = por %p202, %p203
      %p205 = scmp.ne.s32.totalorder %s194, %s195
      %p206 = scmp.eq.s32.totalorder %s33, 0
      %p207 = por %p205, %p206
      %p208 = scmp.ne.s32.totalorder %s194, %s195
      %p209 = scmp.eq.s32.totalorder %s34, 5
      %p210 = por %p208, %p209
      %p212 = scmp.ne.s32.totalorder %s195, %s211
      %p213 = scmp.eq.s32.totalorder %s34, 0
      %p214 = por %p212, %p213
      %s215 = ssub.s32 %s35, %s47
      %p216 = scmp.eq.s32.totalorder %s215, 0
      %s218 = sadd.s32 %s217, 1
      %s219 = scalar_select %p216, %s217, %s218
      %p222 = pneg %p216
      %p223 = scmp.eq.s32.totalorder %s28, 5
      %p224 = por %p222, %p223
      %p225 = scmp.ne.s32.totalorder %s217, %s220
      %p226 = scmp.eq.s32.totalorder %s28, 0
      %p227 = por %p225, %p226
      %p228 = scmp.ne.s32.totalorder %s217, %s220
      %p229 = scmp.eq.s32.totalorder %s33, 5
      %p230 = por %p228, %p229
      %p231 = scmp.ne.s32.totalorder %s220, %s221
      %p232 = scmp.eq.s32.totalorder %s33, 0
      %p233 = por %p231, %p232
      %p234 = scmp.ne.s32.totalorder %s220, %s221
      %p235 = scmp.eq.s32.totalorder %s34, 5
      %p236 = por %p234, %p235
      %p238 = scmp.ne.s32.totalorder %s221, %s237
      %p239 = scmp.eq.s32.totalorder %s34, 0
      %p240 = por %p238, %p239
      %s241 = ssub.s32 %s35, %s47
      %p242 = scmp.eq.s32.totalorder %s241, 0
      %s244 = sadd.s32 %s243, 1
      %s245 = scalar_select %p242, %s243, %s244
      %p248 = pneg %p242
      %p249 = scmp.eq.s32.totalorder %s28, 5
      %p250 = por %p248, %p249
      %p251 = scmp.ne.s32.totalorder %s243, %s246
      %p252 = scmp.eq.s32.totalorder %s28, 0
      %p253 = por %p251, %p252
      %p254 = scmp.ne.s32.totalorder %s243, %s246
      %p255 = scmp.eq.s32.totalorder %s33, 5
      %p256 = por %p254, %p255
      %p257 = scmp.ne.s32.totalorder %s246, %s247
      %p258 = scmp.eq.s32.totalorder %s33, 0
      %p259 = por %p257, %p258
      %p260 = scmp.ne.s32.totalorder %s246, %s247
      %p261 = scmp.eq.s32.totalorder %s34, 5
      %p262 = por %p260, %p261
      %p264 = scmp.ne.s32.totalorder %s247, %s263
      %p265 = scmp.eq.s32.totalorder %s34, 0
      %p266 = por %p264, %p265
      %s267 = ssub.s32 %s35, %s47
      %p268 = scmp.eq.s32.totalorder %s267, 0
      %s270 = sadd.s32 %s269, 1
      %s271 = scalar_select %p268, %s269, %s270
      %p274 = pneg %p268
      %p275 = scmp.eq.s32.totalorder %s28, 5
      %p276 = por %p274, %p275
      %p277 = scmp.ne.s32.totalorder %s269, %s272
      %p278 = scmp.eq.s32.totalorder %s28, 0
      %p279 = por %p277, %p278
      %p280 = scmp.ne.s32.totalorder %s269, %s272
      %p281 = scmp.eq.s32.totalorder %s33, 5
      %p282 = por %p280, %p281
      %p283 = scmp.ne.s32.totalorder %s272, %s273
      %p284 = scmp.eq.s32.totalorder %s33, 0
      %p285 = por %p283, %p284
      %p286 = scmp.ne.s32.totalorder %s272, %s273
      %p287 = scmp.eq.s32.totalorder %s34, 5
      %p288 = por %p286, %p287
      %p290 = scmp.ne.s32.totalorder %s273, %s289
      %p291 = scmp.eq.s32.totalorder %s34, 0
      %p292 = por %p290, %p291
      %s293 = ssub.s32 %s35, %s47
      %p294 = scmp.eq.s32.totalorder %s293, 0
      %s296 = sadd.s32 %s295, 1
      %s297 = scalar_select %p294, %s295, %s296
      %p300 = pneg %p294
      %p301 = scmp.eq.s32.totalorder %s28, 5
      %p302 = por %p300, %p301
      %p303 = scmp.ne.s32.totalorder %s295, %s298
      %p304 = scmp.eq.s32.totalorder %s28, 0
      %p305 = por %p303, %p304
      %p306 = scmp.ne.s32.totalorder %s295, %s298
      %p307 = scmp.eq.s32.totalorder %s33, 5
      %p308 = por %p306, %p307
      %p309 = scmp.ne.s32.totalorder %s298, %s299
      %p310 = scmp.eq.s32.totalorder %s33, 0
      %p311 = por %p309, %p310
      %p312 = scmp.ne.s32.totalorder %s298, %s299
      %p313 = scmp.eq.s32.totalorder %s34, 5
      %p314 = por %p312, %p313
      %p316 = scmp.ne.s32.totalorder %s299, %s315
      %p317 = scmp.eq.s32.totalorder %s34, 0
      %p318 = por %p316, %p317
      %s319 = ssub.s32 %s35, %s47
      %p320 = scmp.eq.s32.totalorder %s319, 0
      %s322 = sadd.s32 %s321, 1
      %s323 = scalar_select %p320, %s321, %s322
      %p326 = pneg %p320
      %p327 = scmp.eq.s32.totalorder %s28, 5
      %p328 = por %p326, %p327
      %p329 = scmp.ne.s32.totalorder %s321, %s324
      %p330 = scmp.eq.s32.totalorder %s28, 0
      %p331 = por %p329, %p330
      %p332 = scmp.ne.s32.totalorder %s321, %s324
      %p333 = scmp.eq.s32.totalorder %s33, 5
      %p334 = por %p332, %p333
      %p335 = scmp.ne.s32.totalorder %s324, %s325
      %p336 = scmp.eq.s32.totalorder %s33, 0
      %p337 = por %p335, %p336
      %p338 = scmp.ne.s32.totalorder %s324, %s325
      %p339 = scmp.eq.s32.totalorder %s34, 5
      %p340 = por %p338, %p339
      %p342 = scmp.ne.s32.totalorder %s325, %s341
      %p343 = scmp.eq.s32.totalorder %s34, 0
      %p344 = por %p342, %p343
      %s345 = ssub.s32 %s35, %s47
      %p346 = scmp.eq.s32.totalorder %s345, 0
      %s348 = sadd.s32 %s347, 1
      %s349 = scalar_select %p346, %s347, %s348
      %p352 = pneg %p346
      %p353 = scmp.eq.s32.totalorder %s28, 5
      %p354 = por %p352, %p353
      %p355 = scmp.ne.s32.totalorder %s347, %s350
      %p356 = scmp.eq.s32.totalorder %s28, 0
      %p357 = por %p355, %p356
      %p358 = scmp.ne.s32.totalorder %s347, %s350
      %p359 = scmp.eq.s32.totalorder %s33, 5
      %p360 = por %p358, %p359
      %p361 = scmp.ne.s32.totalorder %s350, %s351
      %p362 = scmp.eq.s32.totalorder %s33, 0
      %p363 = por %p361, %p362
      %p364 = scmp.ne.s32.totalorder %s350, %s351
      %p365 = scmp.eq.s32.totalorder %s34, 5
      %p366 = por %p364, %p365
      %p368 = scmp.ne.s32.totalorder %s351, %s367
      %p369 = scmp.eq.s32.totalorder %s34, 0
      %p370 = por %p368, %p369
      %s371 = ssub.s32 %s35, %s47
      %p372 = scmp.eq.s32.totalorder %s371, 0
      %s374 = sadd.s32 %s373, 1
      %s375 = scalar_select %p372, %s373, %s374
      %p378 = pneg %p372
      %p379 = scmp.eq.s32.totalorder %s28, 5
      %p380 = por %p378, %p379
      %p381 = scmp.ne.s32.totalorder %s373, %s376
      %p382 = scmp.eq.s32.totalorder %s28, 0
      %p383 = por %p381, %p382
      %p384 = scmp.ne.s32.totalorder %s373, %s376
      %p385 = scmp.eq.s32.totalorder %s33, 5
      %p386 = por %p384, %p385
      %p387 = scmp.ne.s32.totalorder %s376, %s377
      %p388 = scmp.eq.s32.totalorder %s33, 0
      %p389 = por %p387, %p388
      %p390 = scmp.ne.s32.totalorder %s376, %s377
      %p391 = scmp.eq.s32.totalorder %s34, 5
      %p392 = por %p390, %p391
      %p394 = scmp.ne.s32.totalorder %s377, %s393
      %p395 = scmp.eq.s32.totalorder %s34, 0
      %p396 = por %p394, %p395
      %s397 = ssub.s32 %s35, %s47
      %p398 = scmp.eq.s32.totalorder %s397, 0
      %s400 = sadd.s32 %s399, 1
      %s401 = scalar_select %p398, %s399, %s400
      %p404 = pneg %p398
      %p405 = scmp.eq.s32.totalorder %s28, 5
      %p406 = por %p404, %p405
      %p407 = scmp.ne.s32.totalorder %s399, %s402
      %p408 = scmp.eq.s32.totalorder %s28, 0
      %p409 = por %p407, %p408
      %p410 = scmp.ne.s32.totalorder %s399, %s402
      %p411 = scmp.eq.s32.totalorder %s33, 5
      %p412 = por %p410, %p411
      %p413 = scmp.ne.s32.totalorder %s402, %s403
      %p414 = scmp.eq.s32.totalorder %s33, 0
      %p415 = por %p413, %p414
      %p416 = scmp.ne.s32.totalorder %s402, %s403
      %p417 = scmp.eq.s32.totalorder %s34, 5
      %p418 = por %p416, %p417
      %p420 = scmp.ne.s32.totalorder %s403, %s419
      %p421 = scmp.eq.s32.totalorder %s34, 0
      %p422 = por %p420, %p421
      %s423 = ssub.s32 %s35, %s47
      %p424 = scmp.eq.s32.totalorder %s423, 0
      %s426 = sadd.s32 %s425, 1
      %s427 = scalar_select %p424, %s425, %s426
      %p430 = pneg %p424
      %p431 = scmp.eq.s32.totalorder %s28, 5
      %p432 = por %p430, %p431
      %p433 = scmp.ne.s32.totalorder %s425, %s428
      %p434 = scmp.eq.s32.totalorder %s28, 0
      %p435 = por %p433, %p434
      %p436 = scmp.ne.s32.totalorder %s425, %s428
      %p437 = scmp.eq.s32.totalorder %s33, 5
      %p438 = por %p436, %p437
      %p439 = scmp.ne.s32.totalorder %s428, %s429
      %p440 = scmp.eq.s32.totalorder %s33, 0
      %p441 = por %p439, %p440
      %p442 = scmp.ne.s32.totalorder %s428, %s429
      %p443 = scmp.eq.s32.totalorder %s34, 5
      %p444 = por %p442, %p443
      %p446 = scmp.ne.s32.totalorder %s429, %s445
      %p447 = scmp.eq.s32.totalorder %s34, 0
      %p448 = por %p446, %p447
      %s449 = ssub.s32 %s35, %s47
      %p450 = scmp.eq.s32.totalorder %s449, 0
      %s452 = sadd.s32 %s451, 1
      %s453 = scalar_select %p450, %s451, %s452
      %p456 = pneg %p450
      %p457 = scmp.eq.s32.totalorder %s28, 5
      %p458 = por %p456, %p457
      %p459 = scmp.ne.s32.totalorder %s451, %s454
      %p460 = scmp.eq.s32.totalorder %s28, 0
      %p461 = por %p459, %p460
      %p462 = scmp.ne.s32.totalorder %s451, %s454
      %p463 = scmp.eq.s32.totalorder %s33, 5
      %p464 = por %p462, %p463
      %p465 = scmp.ne.s32.totalorder %s454, %s455
      %p466 = scmp.eq.s32.totalorder %s33, 0
      %p467 = por %p465, %p466
      %p468 = scmp.ne.s32.totalorder %s454, %s455
      %p469 = scmp.eq.s32.totalorder %s34, 5
      %p470 = por %p468, %p469
      %p472 = scmp.ne.s32.totalorder %s455, %s471
      %p473 = scmp.eq.s32.totalorder %s34, 0
      %p474 = por %p472, %p473
      %s475 = ssub.s32 %s35, %s47
      %p476 = scmp.eq.s32.totalorder %s475, 0
      %s478 = sadd.s32 %s477, 1
      %s479 = scalar_select %p476, %s477, %s478
      %p482 = pneg %p476
      %p483 = scmp.eq.s32.totalorder %s28, 5
      %p484 = por %p482, %p483
      %p485 = scmp.ne.s32.totalorder %s477, %s480
      %p486 = scmp.eq.s32.totalorder %s28, 0
      %p487 = por %p485, %p486
      %p488 = scmp.ne.s32.totalorder %s477, %s480
      %p489 = scmp.eq.s32.totalorder %s33, 5
      %p490 = por %p488, %p489
      %p491 = scmp.ne.s32.totalorder %s480, %s481
      %p492 = scmp.eq.s32.totalorder %s33, 0
      %p493 = por %p491, %p492
      %p494 = scmp.ne.s32.totalorder %s480, %s481
      %p495 = scmp.eq.s32.totalorder %s34, 5
      %p496 = por %p494, %p495
      %p498 = scmp.ne.s32.totalorder %s481, %s497
      %p499 = scmp.eq.s32.totalorder %s34, 0
      %p500 = por %p498, %p499
      %s501 = ssub.s32 %s35, %s47
      %p502 = scmp.eq.s32.totalorder %s501, 0
      %s504 = sadd.s32 %s503, 1
      %s505 = scalar_select %p502, %s503, %s504
      %p508 = pneg %p502
      %p509 = scmp.eq.s32.totalorder %s28, 5
      %p510 = por %p508, %p509
      %p511 = scmp.ne.s32.totalorder %s503, %s506
      %p512 = scmp.eq.s32.totalorder %s28, 0
      %p513 = por %p511, %p512
      %p514 = scmp.ne.s32.totalorder %s503, %s506
      %p515 = scmp.eq.s32.totalorder %s33, 5
      %p516 = por %p514, %p515
      %p517 = scmp.ne.s32.totalorder %s506, %s507
      %p518 = scmp.eq.s32.totalorder %s33, 0
      %p519 = por %p517, %p518
      %p520 = scmp.ne.s32.totalorder %s506, %s507
      %p521 = scmp.eq.s32.totalorder %s34, 5
      %p522 = por %p520, %p521
      %p524 = scmp.ne.s32.totalorder %s507, %s523
      %p525 = scmp.eq.s32.totalorder %s34, 0
      %p526 = por %p524, %p525
      %s527 = ssub.s32 %s35, %s47
      %p528 = scmp.eq.s32.totalorder %s527, 0
      %s530 = sadd.s32 %s529, 1
      %s531 = scalar_select %p528, %s529, %s530
      %p534 = pneg %p528
      %p535 = scmp.eq.s32.totalorder %s28, 5
      %p536 = por %p534, %p535
      %p537 = scmp.ne.s32.totalorder %s529, %s532
      %p538 = scmp.eq.s32.totalorder %s28, 0
      %p539 = por %p537, %p538
      %p540 = scmp.ne.s32.totalorder %s529, %s532
      %p541 = scmp.eq.s32.totalorder %s33, 5
      %p542 = por %p540, %p541
      %p543 = scmp.ne.s32.totalorder %s532, %s533
      %p544 = scmp.eq.s32.totalorder %s33, 0
      %p545 = por %p543, %p544
      %p546 = scmp.ne.s32.totalorder %s532, %s533
      %p547 = scmp.eq.s32.totalorder %s34, 5
      %p548 = por %p546, %p547
      %p550 = scmp.ne.s32.totalorder %s533, %s549
      %p551 = scmp.eq.s32.totalorder %s34, 0
      %p552 = por %p550, %p551
      %s553 = ssub.s32 %s35, %s47
      %p554 = scmp.eq.s32.totalorder %s553, 0
      %s556 = sadd.s32 %s555, 1
      %s557 = scalar_select %p554, %s555, %s556
      %p560 = pneg %p554
      %p561 = scmp.eq.s32.totalorder %s28, 5
      %p562 = por %p560, %p561
      %p563 = scmp.ne.s32.totalorder %s555, %s558
      %p564 = scmp.eq.s32.totalorder %s28, 0
      %p565 = por %p563, %p564
      %p566 = scmp.ne.s32.totalorder %s555, %s558
      %p567 = scmp.eq.s32.totalorder %s33, 5
      %p568 = por %p566, %p567
      %p569 = scmp.ne.s32.totalorder %s558, %s559
      %p570 = scmp.eq.s32.totalorder %s33, 0
      %p571 = por %p569, %p570
      %p572 = scmp.ne.s32.totalorder %s558, %s559
      %p573 = scmp.eq.s32.totalorder %s34, 5
      %p574 = por %p572, %p573
      %p576 = scmp.ne.s32.totalorder %s559, %s575
      %p577 = scmp.eq.s32.totalorder %s34, 0
      %p578 = por %p576, %p577
      %s580 = sadd.s32 %s579, 1
      %p583 = scmp.eq.s32.totalorder %s28, 5
      %p584 = scmp.ne.s32.totalorder %s579, %s581
      %p585 = scmp.eq.s32.totalorder %s28, 0
      %p586 = por %p584, %p585
      %p587 = scmp.ne.s32.totalorder %s579, %s581
      %p588 = scmp.eq.s32.totalorder %s33, 5
      %p589 = por %p587, %p588
      %p590 = scmp.ne.s32.totalorder %s581, %s582
      %p591 = scmp.eq.s32.totalorder %s33, 0
      %p592 = por %p590, %p591
      %p593 = scmp.ne.s32.totalorder %s581, %s582
      %p594 = scmp.eq.s32.totalorder %s34, 5
      %p595 = por %p593, %p594
      %p597 = scmp.ne.s32.totalorder %s582, %s596
      %p598 = scmp.eq.s32.totalorder %s34, 0
      %p599 = por %p597, %p598
      %p600 = scmp.le.s32.totalorder 1, %s28
      %p601 = scmp.lt.s32.totalorder %s28, 7
      %p602 = pnand %p600, %p601
      %p603 = pneg %p602
      // Predicated region
      $region9: #{equivariant_block.1} parent=5 // pred_check
        _
      $region10: #{equivariant_block.1} parent=5 // pred_check_branch
        %605 = sbr.rel (%p602) target = $region12
      $region11: #{equivariant_block.1} parent=5 // pred_region
        %s606 = ssub.s32 %s28, 1
        // Predicated region
        $region13: #{equivariant_block.1} parent=11 // pred_check
          %p607 = pneg %p61
        $region14: #{equivariant_block.1} parent=11 // pred_check_branch
          %609 = sbr.rel (%p607) target = $region16
        $region15: #{equivariant_block.1} parent=11 // pred_region
          _
        $region16: #{equivariant_block.1} parent=11 // pred_fallthru
          _
        // Predicated region
        $region17: #{equivariant_block.1} parent=11 // pred_check
          %p610 = pneg %p82
        $region18: #{equivariant_block.1} parent=11 // pred_check_branch
          %612 = sbr.rel (%p610) target = $region20
        $region19: #{equivariant_block.1} parent=11 // pred_region
          _
        $region20: #{equivariant_block.1} parent=11 // pred_fallthru
          _
        // Predicated region
        $region21: #{equivariant_block.1} parent=11 // pred_check
          %p613 = pneg %p103
        $region22: #{equivariant_block.1} parent=11 // pred_check_branch
          %615 = sbr.rel (%p613) target = $region24
        $region23: #{equivariant_block.1} parent=11 // pred_region
          _
        $region24: #{equivariant_block.1} parent=11 // pred_fallthru
          _
      $region12: #{equivariant_block.1} parent=5 // pred_fallthru
        _
      %p616 = scmp.lt.s32.totalorder %s28, 6
      // Predicated region
      $region25: #{equivariant_block.1} parent=5 // pred_check
        %p617 = pneg %p616
      $region26: #{equivariant_block.1} parent=5 // pred_check_branch
        %619 = sbr.rel (%p617) target = $region28
      $region27: #{equivariant_block.1} parent=5 // pred_region
        // Predicated region
        $region29: #{equivariant_block.1} parent=27 // pred_check
          %p620 = pneg %p123
        $region30: #{equivariant_block.1} parent=27 // pred_check_branch
          %622 = sbr.rel (%p620) target = $region32
        $region31: #{equivariant_block.1} parent=27 // pred_region
          %p623 = scmp.lt.s32.totalorder %s36, 2
          %s624 = scalar_select %p623, %s36, 2
          %s625 = smul.addr %s624, 8
          %s626 = scalar_lea.vmem %s3, %s625
        $region32: #{equivariant_block.1} parent=27 // pred_fallthru
          _
        // Predicated region
        $region33: #{equivariant_block.1} parent=27 // pred_check
          %p627 = pneg %p149
        $region34: #{equivariant_block.1} parent=27 // pred_check_branch
          %629 = sbr.rel (%p627) target = $region36
        $region35: #{equivariant_block.1} parent=27 // pred_region
          %p630 = scmp.lt.s32.totalorder %s36, 2
          %s631 = scalar_select %p630, %s36, 2
          %s632 = smul.addr %s631, 8
          %s633 = scalar_lea.vmem %s4, %s632
        $region36: #{equivariant_block.1} parent=27 // pred_fallthru
          _
        // Predicated region
        $region37: #{equivariant_block.1} parent=27 // pred_check
          %p634 = pneg %p175
        $region38: #{equivariant_block.1} parent=27 // pred_check_branch
          %636 = sbr.rel (%p634) target = $region40
        $region39: #{equivariant_block.1} parent=27 // pred_region
          %p637 = scmp.lt.s32.totalorder %s36, 2
          %s638 = scalar_select %p637, %s36, 2
          %s639 = smul.addr %s638, 8
          %s640 = scalar_lea.vmem %s5, %s639
        $region40: #{equivariant_block.1} parent=27 // pred_fallthru
          _
        // Predicated region
        $region41: #{equivariant_block.1} parent=27 // pred_check
          %p641 = pneg %p201
        $region42: #{equivariant_block.1} parent=27 // pred_check_branch
          %643 = sbr.rel (%p641) target = $region44
        $region43: #{equivariant_block.1} parent=27 // pred_region
          %p644 = scmp.lt.s32.totalorder %s36, 2
          %s645 = scalar_select %p644, %s36, 2
          %s646 = smul.addr %s645, 8
          %s647 = scalar_lea.vmem %s6, %s646
        $region44: #{equivariant_block.1} parent=27 // pred_fallthru
          _
        // Predicated region
        $region45: #{equivariant_block.1} parent=27 // pred_check
          %p648 = pneg %p227
        $region46: #{equivariant_block.1} parent=27 // pred_check_branch
          %650 = sbr.rel (%p648) target = $region48
        $region47: #{equivariant_block.1} parent=27 // pred_region
          %p651 = scmp.lt.s32.totalorder %s35, 1
          %s652 = scalar_select %p651, %s35, 1
          %s653 = smul.addr %s652, 4
          %s654 = smul.addr %s653, 8
          %s655 = scalar_lea.vmem %s7, %s654
        $region48: #{equivariant_block.1} parent=27 // pred_fallthru
          _
        // Predicated region
        $region49: #{equivariant_block.1} parent=27 // pred_check
          %p656 = pneg %p253
        $region50: #{equivariant_block.1} parent=27 // pred_check_branch
          %658 = sbr.rel (%p656) target = $region52
        $region51: #{equivariant_block.1} parent=27 // pred_region
          %p659 = scmp.lt.s32.totalorder %s35, 1
          %s660 = scalar_select %p659, %s35, 1
          %s661 = smul.addr %s660, 4
          %s662 = smul.addr %s661, 8
          %s663 = scalar_lea.vmem %s8, %s662
        $region52: #{equivariant_block.1} parent=27 // pred_fallthru
          _
        // Predicated region
        $region53: #{equivariant_block.1} parent=27 // pred_check
          %p664 = pneg %p279
        $region54: #{equivariant_block.1} parent=27 // pred_check_branch
          %666 = sbr.rel (%p664) target = $region56
        $region55: #{equivariant_block.1} parent=27 // pred_region
          %p667 = scmp.lt.s32.totalorder %s35, 1
          %s668 = scalar_select %p667, %s35, 1
          %s669 = scalar_lea.vmem %s9, %s668
        $region56: #{equivariant_block.1} parent=27 // pred_fallthru
          _
        // Predicated region
        $region57: #{equivariant_block.1} parent=27 // pred_check
          %p670 = pneg %p305
        $region58: #{equivariant_block.1} parent=27 // pred_check_branch
          %672 = sbr.rel (%p670) target = $region60
        $region59: #{equivariant_block.1} parent=27 // pred_region
          %p673 = scmp.lt.s32.totalorder %s35, 1
          %s674 = scalar_select %p673, %s35, 1
          %s675 = scalar_lea.vmem %s10, %s674
        $region60: #{equivariant_block.1} parent=27 // pred_fallthru
          _
        // Predicated region
        $region61: #{equivariant_block.1} parent=27 // pred_check
          %p676 = pneg %p331
        $region62: #{equivariant_block.1} parent=27 // pred_check_branch
          %678 = sbr.rel (%p676) target = $region64
        $region63: #{equivariant_block.1} parent=27 // pred_region
          %p679 = scmp.lt.s32.totalorder %s35, 1
          %s680 = scalar_select %p679, %s35, 1
          %s681 = scalar_lea.vmem %s11, %s680
        $region64: #{equivariant_block.1} parent=27 // pred_fallthru
          _
        // Predicated region
        $region65: #{equivariant_block.1} parent=27 // pred_check
          %p682 = pneg %p357
        $region66: #{equivariant_block.1} parent=27 // pred_check_branch
          %684 = sbr.rel (%p682) target = $region68
        $region67: #{equivariant_block.1} parent=27 // pred_region
          %p685 = scmp.lt.s32.totalorder %s35, 1
          %s686 = scalar_select %p685, %s35, 1
          %s687 = smul.addr %s686, 4
          %s688 = smul.addr %s687, 8
          %s689 = scalar_lea.vmem %s12, %s688
        $region68: #{equivariant_block.1} parent=27 // pred_fallthru
          _
        // Predicated region
        $region69: #{equivariant_block.1} parent=27 // pred_check
          %p690 = pneg %p383
        $region70: #{equivariant_block.1} parent=27 // pred_check_branch
          %692 = sbr.rel (%p690) target = $region72
        $region71: #{equivariant_block.1} parent=27 // pred_region
          %p693 = scmp.lt.s32.totalorder %s35, 1
          %s694 = scalar_select %p693, %s35, 1
          %s695 = scalar_lea.vmem %s13, %s694
        $region72: #{equivariant_block.1} parent=27 // pred_fallthru
          _
        // Predicated region
        $region73: #{equivariant_block.1} parent=27 // pred_check
          %p696 = pneg %p409
        $region74: #{equivariant_block.1} parent=27 // pred_check_branch
          %698 = sbr.rel (%p696) target = $region76
        $region75: #{equivariant_block.1} parent=27 // pred_region
          %p699 = scmp.lt.s32.totalorder %s35, 1
          %s700 = scalar_select %p699, %s35, 1
          %s701 = scalar_lea.vmem %s14, %s700
        $region76: #{equivariant_block.1} parent=27 // pred_fallthru
          _
        // Predicated region
        $region77: #{equivariant_block.1} parent=27 // pred_check
          %p702 = pneg %p435
        $region78: #{equivariant_block.1} parent=27 // pred_check_branch
          %704 = sbr.rel (%p702) target = $region80
        $region79: #{equivariant_block.1} parent=27 // pred_region
          %p705 = scmp.lt.s32.totalorder %s35, 1
          %s706 = scalar_select %p705, %s35, 1
          %s707 = scalar_lea.vmem %s15, %s706
        $region80: #{equivariant_block.1} parent=27 // pred_fallthru
          _
        // Predicated region
        $region81: #{equivariant_block.1} parent=27 // pred_check
          %p708 = pneg %p461
        $region82: #{equivariant_block.1} parent=27 // pred_check_branch
          %710 = sbr.rel (%p708) target = $region84
        $region83: #{equivariant_block.1} parent=27 // pred_region
          %p711 = scmp.lt.s32.totalorder %s35, 1
          %s712 = scalar_select %p711, %s35, 1
          %s713 = smul.addr %s712, 4
          %s714 = smul.addr %s713, 8
          %s715 = scalar_lea.vmem %s16, %s714
        $region84: #{equivariant_block.1} parent=27 // pred_fallthru
          _
        // Predicated region
        $region85: #{equivariant_block.1} parent=27 // pred_check
          %p716 = pneg %p487
        $region86: #{equivariant_block.1} parent=27 // pred_check_branch
          %718 = sbr.rel (%p716) target = $region88
        $region87: #{equivariant_block.1} parent=27 // pred_region
          %p719 = scmp.lt.s32.totalorder %s35, 1
          %s720 = scalar_select %p719, %s35, 1
          %s721 = smul.addr %s720, 4
          %s722 = smul.addr %s721, 8
          %s723 = scalar_lea.vmem %s17, %s722
        $region88: #{equivariant_block.1} parent=27 // pred_fallthru
          _
        // Predicated region
        $region89: #{equivariant_block.1} parent=27 // pred_check
          %p724 = pneg %p513
        $region90: #{equivariant_block.1} parent=27 // pred_check_branch
          %726 = sbr.rel (%p724) target = $region92
        $region91: #{equivariant_block.1} parent=27 // pred_region
          %p727 = scmp.lt.s32.totalorder %s35, 1
          %s728 = scalar_select %p727, %s35, 1
          %s729 = scalar_lea.vmem %s18, %s728
        $region92: #{equivariant_block.1} parent=27 // pred_fallthru
          _
        // Predicated region
        $region93: #{equivariant_block.1} parent=27 // pred_check
          %p730 = pneg %p539
        $region94: #{equivariant_block.1} parent=27 // pred_check_branch
          %732 = sbr.rel (%p730) target = $region96
        $region95: #{equivariant_block.1} parent=27 // pred_region
          %p733 = scmp.lt.s32.totalorder %s35, 1
          %s734 = scalar_select %p733, %s35, 1
          %s735 = smul.addr %s734, 4
          %s736 = smul.addr %s735, 8
          %s737 = scalar_lea.vmem %s19, %s736
        $region96: #{equivariant_block.1} parent=27 // pred_fallthru
          _
        // Predicated region
        $region97: #{equivariant_block.1} parent=27 // pred_check
          %p738 = pneg %p565
        $region98: #{equivariant_block.1} parent=27 // pred_check_branch
          %740 = sbr.rel (%p738) target = $region100
        $region99: #{equivariant_block.1} parent=27 // pred_region
          %p741 = scmp.lt.s32.totalorder %s35, 1
          %s742 = scalar_select %p741, %s35, 1
          %s743 = scalar_lea.vmem %s20, %s742
        $region100: #{equivariant_block.1} parent=27 // pred_fallthru
          _
      $region28: #{equivariant_block.1} parent=5 // pred_fallthru
        _
      %p744 = scmp.le.s32.totalorder 1, %s28
      %p745 = scmp.lt.s32.totalorder %s28, 7
      %p746 = pnand %p744, %p745
      %p747 = pneg %p746
      // Predicated region
      $region101: #{equivariant_block.1} parent=5 // pred_check
        _
      $region102: #{equivariant_block.1} parent=5 // pred_check_branch
        %749 = sbr.rel (%p746) target = $region104
      $region103: #{equivariant_block.1} parent=5 // pred_region
        %s750 = ssub.s32 %s28, 1
        %p751 = pneg %p61
        %p752 = pneg %p58
        %p753 = pneg %p82
        %p754 = pneg %p79
        %p755 = pneg %p103
        %p756 = pneg %p100
        %p757 = scmp.lt.s32.totalorder %s38, 2
        %s758 = scalar_select %p757, %s38, 2
        %s759 = smul.addr %s758, 8
        %s760 = scalar_lea.vmem %s3, %s759
        %p761 = pneg %p129
        %p762 = pneg %p126
        %p763 = scmp.lt.s32.totalorder %s38, 2
        %s764 = scalar_select %p763, %s38, 2
        %s765 = smul.addr %s764, 8
        %s766 = scalar_lea.vmem %s4, %s765
        %p767 = pneg %p155
        %p768 = pneg %p152
        %p769 = scmp.lt.s32.totalorder %s38, 2
        %s770 = scalar_select %p769, %s38, 2
        %s771 = smul.addr %s770, 8
        %s772 = scalar_lea.vmem %s5, %s771
        %p773 = pneg %p181
        %p774 = pneg %p178
        %p775 = scmp.lt.s32.totalorder %s38, 2
        %s776 = scalar_select %p775, %s38, 2
        %s777 = smul.addr %s776, 8
        %s778 = scalar_lea.vmem %s6, %s777
        %p779 = pneg %p207
        %p780 = pneg %p204
        %p781 = scmp.lt.s32.totalorder %s37, 1
        %s782 = scalar_select %p781, %s37, 1
        %s783 = smul.addr %s782, 4
        %s784 = smul.addr %s783, 8
        %s785 = scalar_lea.vmem %s7, %s784
        %p786 = pneg %p233
        %p787 = pneg %p230
        %p788 = scmp.lt.s32.totalorder %s37, 1
        %s789 = scalar_select %p788, %s37, 1
        %s790 = smul.addr %s789, 4
        %s791 = smul.addr %s790, 8
        %s792 = scalar_lea.vmem %s8, %s791
        %p793 = pneg %p259
        %p794 = pneg %p256
        %p795 = scmp.lt.s32.totalorder %s37, 1
        %s796 = scalar_select %p795, %s37, 1
        %s797 = scalar_lea.vmem %s9, %s796
        %p798 = pneg %p285
        %p799 = pneg %p282
        %p800 = scmp.lt.s32.totalorder %s37, 1
        %s801 = scalar_select %p800, %s37, 1
        %s802 = scalar_lea.vmem %s10, %s801
        %p803 = pneg %p311
        %p804 = pneg %p308
        %p805 = scmp.lt.s32.totalorder %s37, 1
        %s806 = scalar_select %p805, %s37, 1
        %s807 = scalar_lea.vmem %s11, %s806
        %p808 = pneg %p337
        %p809 = pneg %p334
        %p810 = scmp.lt.s32.totalorder %s37, 1
        %s811 = scalar_select %p810, %s37, 1
        %s812 = smul.addr %s811, 4
        %s813 = smul.addr %s812, 8
        %s814 = scalar_lea.vmem %s12, %s813
        %p815 = pneg %p363
        %p816 = pneg %p360
        %p817 = scmp.lt.s32.totalorder %s37, 1
        %s818 = scalar_select %p817, %s37, 1
        %s819 = scalar_lea.vmem %s13, %s818
        %p820 = pneg %p389
        %p821 = pneg %p386
        %p822 = scmp.lt.s32.totalorder %s37, 1
        %s823 = scalar_select %p822, %s37, 1
        %s824 = scalar_lea.vmem %s14, %s823
        %p825 = pneg %p415
        %p826 = pneg %p412
        %p827 = scmp.lt.s32.totalorder %s37, 1
        %s828 = scalar_select %p827, %s37, 1
        %s829 = scalar_lea.vmem %s15, %s828
        %p830 = pneg %p441
        %p831 = pneg %p438
        %p832 = scmp.lt.s32.totalorder %s37, 1
        %s833 = scalar_select %p832, %s37, 1
        %s834 = smul.addr %s833, 4
        %s835 = smul.addr %s834, 8
        %s836 = scalar_lea.vmem %s16, %s835
        %p837 = pneg %p467
        %p838 = pneg %p464
        %p839 = scmp.lt.s32.totalorder %s37, 1
        %s840 = scalar_select %p839, %s37, 1
        %s841 = smul.addr %s840, 4
        %s842 = smul.addr %s841, 8
        %s843 = scalar_lea.vmem %s17, %s842
        %p844 = pneg %p493
        %p845 = pneg %p490
        %p846 = scmp.lt.s32.totalorder %s37, 1
        %s847 = scalar_select %p846, %s37, 1
        %s848 = scalar_lea.vmem %s18, %s847
        %p849 = pneg %p519
        %p850 = pneg %p516
        %p851 = scmp.lt.s32.totalorder %s37, 1
        %s852 = scalar_select %p851, %s37, 1
        %s853 = smul.addr %s852, 4
        %s854 = smul.addr %s853, 8
        %s855 = scalar_lea.vmem %s19, %s854
        %p856 = pneg %p545
        %p857 = pneg %p542
        %p858 = scmp.lt.s32.totalorder %s37, 1
        %s859 = scalar_select %p858, %s37, 1
        %s860 = scalar_lea.vmem %s20, %s859
        %p861 = pneg %p571
        %p862 = pneg %p568
        %p863 = pneg %p592
        %p864 = pneg %p589
        %p865 = scmp.lt.s32.totalorder %s38, 2
        %s866 = scalar_select %p865, %s38, 2
        %s867 = smul.addr %s866, 8
        %s868 = scalar_lea.vmem %s3, %s867
        %p869 = scmp.lt.s32.totalorder %s38, 2
        %s870 = scalar_select %p869, %s38, 2
        %s871 = smul.addr %s870, 8
        %s872 = scalar_lea.vmem %s4, %s871
        %p873 = scmp.lt.s32.totalorder %s38, 2
        %s874 = scalar_select %p873, %s38, 2
        %s875 = smul.addr %s874, 8
        %s876 = scalar_lea.vmem %s5, %s875
        %p877 = scmp.lt.s32.totalorder %s38, 2
        %s878 = scalar_select %p877, %s38, 2
        %s879 = smul.addr %s878, 8
        %s880 = scalar_lea.vmem %s6, %s879
        %p881 = scmp.lt.s32.totalorder %s37, 1
        %s882 = scalar_select %p881, %s37, 1
        %s883 = smul.addr %s882, 4
        %s884 = smul.addr %s883, 8
        %s885 = scalar_lea.vmem %s7, %s884
        %p886 = scmp.lt.s32.totalorder %s37, 1
        %s887 = scalar_select %p886, %s37, 1
        %s888 = smul.addr %s887, 4
        %s889 = smul.addr %s888, 8
        %s890 = scalar_lea.vmem %s8, %s889
        %p891 = scmp.lt.s32.totalorder %s37, 1
        %s892 = scalar_select %p891, %s37, 1
        %s893 = scalar_lea.vmem %s9, %s892
        %p894 = scmp.lt.s32.totalorder %s37, 1
        %s895 = scalar_select %p894, %s37, 1
        %s896 = scalar_lea.vmem %s10, %s895
        %p897 = scmp.lt.s32.totalorder %s37, 1
        %s898 = scalar_select %p897, %s37, 1
        %s899 = scalar_lea.vmem %s11, %s898
        %p900 = scmp.lt.s32.totalorder %s37, 1
        %s901 = scalar_select %p900, %s37, 1
        %s902 = smul.addr %s901, 4
        %s903 = smul.addr %s902, 8
        %s904 = scalar_lea.vmem %s12, %s903
        %p905 = scmp.lt.s32.totalorder %s37, 1
        %s906 = scalar_select %p905, %s37, 1
        %s907 = scalar_lea.vmem %s13, %s906
        %p908 = scmp.lt.s32.totalorder %s37, 1
        %s909 = scalar_select %p908, %s37, 1
        %s910 = scalar_lea.vmem %s14, %s909
        %p911 = scmp.lt.s32.totalorder %s37, 1
        %s912 = scalar_select %p911, %s37, 1
        %s913 = scalar_lea.vmem %s15, %s912
        %p914 = scmp.lt.s32.totalorder %s37, 1
        %s915 = scalar_select %p914, %s37, 1
        %s916 = smul.addr %s915, 4
        %s917 = smul.addr %s916, 8
        %s918 = scalar_lea.vmem %s16, %s917
        %p919 = scmp.lt.s32.totalorder %s37, 1
        %s920 = scalar_select %p919, %s37, 1
        %s921 = smul.addr %s920, 4
        %s922 = smul.addr %s921, 8
        %s923 = scalar_lea.vmem %s17, %s922
        %p924 = scmp.lt.s32.totalorder %s37, 1
        %s925 = scalar_select %p924, %s37, 1
        %s926 = scalar_lea.vmem %s18, %s925
        %p927 = scmp.lt.s32.totalorder %s37, 1
        %s928 = scalar_select %p927, %s37, 1
        %s929 = smul.addr %s928, 4
        %s930 = smul.addr %s929, 8
        %s931 = scalar_lea.vmem %s19, %s930
        %p932 = scmp.lt.s32.totalorder %s37, 1
        %s933 = scalar_select %p932, %s37, 1
        %s934 = scalar_lea.vmem %s20, %s933
        %p935 = scmp.eq.s32.totalorder %s38, 0
        // Predicated region
        $region105: #{equivariant_block.1} parent=103 // pred_check
          %p936 = pneg %p935
        $region106: #{equivariant_block.1} parent=103 // pred_check_branch
          %938 = sbr.rel (%p936) target = $region108
        $region107: #{equivariant_block.1} parent=103 // pred_region
          %p939 = scmp.eq.s32.totalorder %s37, 0
          // Predicated region
          $region109: #{equivariant_block.1} parent=107 // pred_check
            %p940 = pneg %p939
          $region110: #{equivariant_block.1} parent=107 // pred_check_branch
            %942 = sbr.rel (%p940) target = $region112
          $region111: #{equivariant_block.1} parent=107 // pred_region
            %v943 = vld [vmem:[%s0] sm:$0xff]
            %vm944 = vcmask 261120
            %945 = vst.msk [vmem:[#allocation2] sm:$0xff] %vm944, %v943
          $region112: #{equivariant_block.1} parent=107 // pred_fallthru
            _
          %vm946 = vcmask 261120
          %947 = vst.msk [vmem:[#allocation3] sm:$0xff] %vm946, 0.0
          %v948 = vld [vmem:[#allocation2] sm:$0xff]
          %v949 = vld [vmem:[%s885] sm:$0xff]
          %v950 = vld [vmem:[%s885 + $0x8] sm:$0xff]
          %v951 = vld [vmem:[%s885 + $0x10] sm:$0xff]
          %v952 = vld [vmem:[%s885 + $0x18] sm:$0xff]
          %v954 = vsel %vm946, %v948, 0
          %956 = vmatprep.subr.mxu0 0.0
          %957 = vmatpush1.msra.mxu0 %v949
          %958 = vmatprep.subr.mxu0 0.0
          %959 = vmatpush1.msra.mxu0 %v950
          %960 = vmatprep.subr.mxu0 0.0
          %961 = vmatpush1.msra.mxu0 %v951
          %962 = vmatprep.subr.mxu0 0.0
          %963 = vmatpush1.msra.mxu0 %v952
          %964 = vmatprep.subr.mxu0 0.0
          %965 = vmatpush1.msra.mxu0 0.0
          %966 = vmatprep.subr.mxu0 0.0
          %967 = vmatpush1.msra.mxu0 0.0
          %968 = vmatprep.subr.mxu0 0.0
          %969 = vmatpush1.msra.mxu0 0.0
          %970 = vmatprep.subr.mxu0 0.0
          %971 = vmatpush1.msra.mxu0 0.0
          %972 = vmatprep.subr.mxu0 0.0
          %973 = vmatpush1.msra.mxu0 0.0
          %974 = vmatprep.subr.mxu0 0.0
          %975 = vmatpush1.msra.mxu0 0.0
          %976 = vmatprep.subr.mxu0 0.0
          %977 = vmatpush1.msra.mxu0 0.0
          %978 = vmatprep.subr.mxu0 0.0
          %979 = vmatpush1.msra.mxu0 0.0
          %980 = vmatprep.subr.mxu0 0.0
          %981 = vmatpush1.msra.mxu0 0.0
          %982 = vmatprep.subr.mxu0 0.0
          %983 = vmatpush1.msra.mxu0 0.0
          %984 = vmatprep.subr.mxu0 0.0
          %985 = vmatpush1.msra.mxu0 0.0
          %986 = vmatprep.subr.mxu0 0.0
          %987 = vmatpush1.msra.mxu0 0.0
          %988 = vmatprep.subr.mxu0 0.0
          %989 = vmatpush1.msra.mxu0 0.0
          %990 = vmatprep.subr.mxu0 0.0
          %991 = vmatpush1.msra.mxu0 0.0
          %992 = vmatprep.subr.mxu0 0.0
          %993 = vmatpush1.msra.mxu0 0.0
          %994 = vmatprep.subr.mxu0 0.0
          %995 = vmatpush1.msra.mxu0 0.0
          %996 = vmatprep.subr.mxu0 0.0
          %997 = vmatpush1.msra.mxu0 0.0
          %998 = vmatprep.subr.mxu0 0.0
          %999 = vmatpush1.msra.mxu0 0.0
          %1000 = vmatprep.subr.mxu0 0.0
          %1001 = vmatpush1.msra.mxu0 0.0
          %1002 = vmatprep.subr.mxu0 0.0
          %1003 = vmatpush1.msra.mxu0 0.0
          %1004 = vmatprep.subr.mxu0 0.0
          %1005 = vmatpush1.msra.mxu0 0.0
          %1006 = vmatprep.subr.mxu0 0.0
          %1007 = vmatpush1.msra.mxu0 0.0
          %1008 = vmatprep.subr.mxu0 0.0
          %1009 = vmatpush1.msra.mxu0 0.0
          %1010 = vmatprep.subr.mxu0 0.0
          %1011 = vmatpush1.msra.mxu0 0.0
          %1012 = vmatprep.subr.mxu0 0.0
          %1013 = vmatpush1.msra.mxu0 0.0
          %1014 = vmatprep.subr.mxu0 0.0
          %1015 = vmatpush1.msra.mxu0 0.0
          %1016 = vmatprep.subr.mxu0 0.0
          %1017 = vmatpush1.msra.mxu0 0.0
          %1018 = vmatprep.subr.mxu0 0.0
          %1019 = vmatpush1.msra.mxu0 0.0
          %1020 = vmatprep.mubr.f32.mxu0 0.0
          %1021 = vmatmul.mubr.f32.gmra.mrb[0].mxu0 %v954
          %v1022 = vpop.f32.mrb[0].mxu0
          %v1023 = vadd.f32 0.0, %v1022
          %v1024 = vpop.f32.mrb[0].mxu0
          %1025 = vdwg.mxu0
          %1026 = vst.msk [vmem:[#allocation4] sm:$0xff] %vm946, %v1023
          %v1027 = vld [vmem:[#allocation2] sm:$0xff]
          %v1028 = vld [vmem:[%s890] sm:$0xff]
          %v1029 = vld [vmem:[%s890 + $0x8] sm:$0xff]
          %v1030 = vld [vmem:[%s890 + $0x10] sm:$0xff]
          %v1031 = vld [vmem:[%s890 + $0x18] sm:$0xff]
          %v1033 = vsel %vm946, %v1027, 0
          %1035 = vmatprep.subr.mxu0 0.0
          %1036 = vmatpush1.msra.mxu0 %v1028
          %1037 = vmatprep.subr.mxu0 0.0
          %1038 = vmatpush1.msra.mxu0 %v1029
          %1039 = vmatprep.subr.mxu0 0.0
          %1040 = vmatpush1.msra.mxu0 %v1030
          %1041 = vmatprep.subr.mxu0 0.0
          %1042 = vmatpush1.msra.mxu0 %v1031
          %1043 = vmatprep.subr.mxu0 0.0
          %1044 = vmatpush1.msra.mxu0 0.0
          %1045 = vmatprep.subr.mxu0 0.0
          %1046 = vmatpush1.msra.mxu0 0.0
          %1047 = vmatprep.subr.mxu0 0.0
          %1048 = vmatpush1.msra.mxu0 0.0
          %1049 = vmatprep.subr.mxu0 0.0
          %1050 = vmatpush1.msra.mxu0 0.0
          %1051 = vmatprep.subr.mxu0 0.0
          %1052 = vmatpush1.msra.mxu0 0.0
          %1053 = vmatprep.subr.mxu0 0.0
          %1054 = vmatpush1.msra.mxu0 0.0
          %1055 = vmatprep.subr.mxu0 0.0
          %1056 = vmatpush1.msra.mxu0 0.0
          %1057 = vmatprep.subr.mxu0 0.0
          %1058 = vmatpush1.msra.mxu0 0.0
          %1059 = vmatprep.subr.mxu0 0.0
          %1060 = vmatpush1.msra.mxu0 0.0
          %1061 = vmatprep.subr.mxu0 0.0
          %1062 = vmatpush1.msra.mxu0 0.0
          %1063 = vmatprep.subr.mxu0 0.0
          %1064 = vmatpush1.msra.mxu0 0.0
          %1065 = vmatprep.subr.mxu0 0.0
          %1066 = vmatpush1.msra.mxu0 0.0
          %1067 = vmatprep.subr.mxu0 0.0
          %1068 = vmatpush1.msra.mxu0 0.0
          %1069 = vmatprep.subr.mxu0 0.0
          %1070 = vmatpush1.msra.mxu0 0.0
          %1071 = vmatprep.subr.mxu0 0.0
          %1072 = vmatpush1.msra.mxu0 0.0
          %1073 = vmatprep.subr.mxu0 0.0
          %1074 = vmatpush1.msra.mxu0 0.0
          %1075 = vmatprep.subr.mxu0 0.0
          %1076 = vmatpush1.msra.mxu0 0.0
          %1077 = vmatprep.subr.mxu0 0.0
          %1078 = vmatpush1.msra.mxu0 0.0
          %1079 = vmatprep.subr.mxu0 0.0
          %1080 = vmatpush1.msra.mxu0 0.0
          %1081 = vmatprep.subr.mxu0 0.0
          %1082 = vmatpush1.msra.mxu0 0.0
          %1083 = vmatprep.subr.mxu0 0.0
          %1084 = vmatpush1.msra.mxu0 0.0
          %1085 = vmatprep.subr.mxu0 0.0
          %1086 = vmatpush1.msra.mxu0 0.0
          %1087 = vmatprep.subr.mxu0 0.0
          %1088 = vmatpush1.msra.mxu0 0.0
          %1089 = vmatprep.subr.mxu0 0.0
          %1090 = vmatpush1.msra.mxu0 0.0
          %1091 = vmatprep.subr.mxu0 0.0
          %1092 = vmatpush1.msra.mxu0 0.0
          %1093 = vmatprep.subr.mxu0 0.0
          %1094 = vmatpush1.msra.mxu0 0.0
          %1095 = vmatprep.subr.mxu0 0.0
          %1096 = vmatpush1.msra.mxu0 0.0
          %1097 = vmatprep.subr.mxu0 0.0
          %1098 = vmatpush1.msra.mxu0 0.0
          %1099 = vmatprep.mubr.f32.mxu0 0.0
          %1100 = vmatmul.mubr.f32.gmra.mrb[0].mxu0 %v1033
          %v1101 = vpop.f32.mrb[0].mxu0
          %v1102 = vadd.f32 0.0, %v1101
          %v1103 = vpop.f32.mrb[0].mxu0
          %1104 = vdwg.mxu0
          %1105 = vst.msk [vmem:[#allocation5] sm:$0xff] %vm946, %v1102
        $region108: #{equivariant_block.1} parent=103 // pred_fallthru
          _
        %v1106 = vld [vmem:[%s868] sm:$0xff]
        %v1107 = vld [vmem:[%s872] sm:$0xff]
        %v1108 = vlaneseq
        %v1109 = vand.u32 %v1108, 127
        %1110 = vset.pattern.permute.xlu0 0
        %1111 = vperm.xlu0 %1110, %v1106
        %v1112 = vpop.permute.xlu0 %1111
        %vm1113 = vcmp.eq.s32.totalorder %v1109, %v1112
        %v1114 = vsel %vm1113, 1, 0
        %v1115 = vcvt.s32.f32 %v1114
        %1116 = vset.pattern.permute.xlu0 0
        %1117 = vperm.xlu0 %1116, %v1107
        %v1118 = vpop.permute.xlu0 %1117
        %vm1119 = vcmp.eq.s32.totalorder %v1109, %v1118
        %v1120 = vsel %vm1119, 1, 0
        %v1121 = vcvt.s32.f32 %v1120
        %v1122 = vsub.f32 %v1115, %v1121
        %v1123 = vld [vmem:[%s1] sm:$0xff]
        %vm1124 = vcmask 64512
        %v1126 = vsel %vm1124, %v1122, 0
        %1128 = vmatprep.subr.mxu0 0.0
        %1129 = vmatpush1.msra.mxu0 %v1123
        %1130 = vmatprep.subr.mxu0 0.0
        %1131 = vmatpush1.msra.mxu0 0.0
        %1132 = vmatprep.subr.mxu0 0.0
        %1133 = vmatpush1.msra.mxu0 0.0
        %1134 = vmatprep.subr.mxu0 0.0
        %1135 = vmatpush1.msra.mxu0 0.0
        %1136 = vmatprep.subr.mxu0 0.0
        %1137 = vmatpush1.msra.mxu0 0.0
        %1138 = vmatprep.subr.mxu0 0.0
        %1139 = vmatpush1.msra.mxu0 0.0
        %1140 = vmatprep.subr.mxu0 0.0
        %1141 = vmatpush1.msra.mxu0 0.0
        %1142 = vmatprep.subr.mxu0 0.0
        %1143 = vmatpush1.msra.mxu0 0.0
        %1144 = vmatprep.subr.mxu0 0.0
        %1145 = vmatpush1.msra.mxu0 0.0
        %1146 = vmatprep.subr.mxu0 0.0
        %1147 = vmatpush1.msra.mxu0 0.0
        %1148 = vmatprep.subr.mxu0 0.0
        %1149 = vmatpush1.msra.mxu0 0.0
        %1150 = vmatprep.subr.mxu0 0.0
        %1151 = vmatpush1.msra.mxu0 0.0
        %1152 = vmatprep.subr.mxu0 0.0
        %1153 = vmatpush1.msra.mxu0 0.0
        %1154 = vmatprep.subr.mxu0 0.0
        %1155 = vmatpush1.msra.mxu0 0.0
        %1156 = vmatprep.subr.mxu0 0.0
        %1157 = vmatpush1.msra.mxu0 0.0
        %1158 = vmatprep.subr.mxu0 0.0
        %1159 = vmatpush1.msra.mxu0 0.0
        %1160 = vmatprep.subr.mxu0 0.0
        %1161 = vmatpush1.msra.mxu0 0.0
        %1162 = vmatprep.subr.mxu0 0.0
        %1163 = vmatpush1.msra.mxu0 0.0
        %1164 = vmatprep.subr.mxu0 0.0
        %1165 = vmatpush1.msra.mxu0 0.0
        %1166 = vmatprep.subr.mxu0 0.0
        %1167 = vmatpush1.msra.mxu0 0.0
        %1168 = vmatprep.subr.mxu0 0.0
        %1169 = vmatpush1.msra.mxu0 0.0
        %1170 = vmatprep.subr.mxu0 0.0
        %1171 = vmatpush1.msra.mxu0 0.0
        %1172 = vmatprep.subr.mxu0 0.0
        %1173 = vmatpush1.msra.mxu0 0.0
        %1174 = vmatprep.subr.mxu0 0.0
        %1175 = vmatpush1.msra.mxu0 0.0
        %1176 = vmatprep.subr.mxu0 0.0
        %1177 = vmatpush1.msra.mxu0 0.0
        %1178 = vmatprep.subr.mxu0 0.0
        %1179 = vmatpush1.msra.mxu0 0.0
        %1180 = vmatprep.subr.mxu0 0.0
        %1181 = vmatpush1.msra.mxu0 0.0
        %1182 = vmatprep.subr.mxu0 0.0
        %1183 = vmatpush1.msra.mxu0 0.0
        %1184 = vmatprep.subr.mxu0 0.0
        %1185 = vmatpush1.msra.mxu0 0.0
        %1186 = vmatprep.subr.mxu0 0.0
        %1187 = vmatpush1.msra.mxu0 0.0
        %1188 = vmatprep.subr.mxu0 0.0
        %1189 = vmatpush1.msra.mxu0 0.0
        %1190 = vmatprep.subr.mxu0 0.0
        %1191 = vmatpush1.msra.mxu0 0.0
        %1192 = vmatprep.mubr.f32.mxu0 0.0
        %1193 = vmatmul.mubr.f32.gmra.mrb[0].mxu0 %v1126
        %v1194 = vpop.f32.mrb[0].mxu0
        %v1195 = vadd.f32 0.0, %v1194
        %v1196 = vpop.f32.mrb[0].mxu0
        %1197 = vdwg.mxu0
        %v1198 = vmul.f32 %v1195, %v1195
        %vm1199 = vcmask 23552
        %v1200 = vsel %vm1199, %v1198, 0.0
        %1201 = vadd.xlane.f32.xlu0 %v1200
        %v1202 = vpop.xlane.xlu0 %1201
        %v1203 = vld [vmem:[#allocation4] sm:$0xff]
        %v1204 = vld [vmem:[#allocation5] sm:$0xff]
        %v1206 = vsel %vm1124, %v1121, 0
        %1208 = vmatprep.subr.mxu0 0.0
        %1209 = vmatpush1.msra.mxu0 %v1204
        %1210 = vmatprep.subr.mxu0 0.0
        %1211 = vmatpush1.msra.mxu0 0.0
        %1212 = vmatprep.subr.mxu0 0.0
        %1213 = vmatpush1.msra.mxu0 0.0
        %1214 = vmatprep.subr.mxu0 0.0
        %1215 = vmatpush1.msra.mxu0 0.0
        %1216 = vmatprep.subr.mxu0 0.0
        %1217 = vmatpush1.msra.mxu0 0.0
        %1218 = vmatprep.subr.mxu0 0.0
        %1219 = vmatpush1.msra.mxu0 0.0
        %1220 = vmatprep.subr.mxu0 0.0
        %1221 = vmatpush1.msra.mxu0 0.0
        %1222 = vmatprep.subr.mxu0 0.0
        %1223 = vmatpush1.msra.mxu0 0.0
        %1224 = vmatprep.subr.mxu0 0.0
        %1225 = vmatpush1.msra.mxu0 0.0
        %1226 = vmatprep.subr.mxu0 0.0
        %1227 = vmatpush1.msra.mxu0 0.0
        %1228 = vmatprep.subr.mxu0 0.0
        %1229 = vmatpush1.msra.mxu0 0.0
        %1230 = vmatprep.subr.mxu0 0.0
        %1231 = vmatpush1.msra.mxu0 0.0
        %1232 = vmatprep.subr.mxu0 0.0
        %1233 = vmatpush1.msra.mxu0 0.0
        %1234 = vmatprep.subr.mxu0 0.0
        %1235 = vmatpush1.msra.mxu0 0.0
        %1236 = vmatprep.subr.mxu0 0.0
        %1237 = vmatpush1.msra.mxu0 0.0
        %1238 = vmatprep.subr.mxu0 0.0
        %1239 = vmatpush1.msra.mxu0 0.0
        %1240 = vmatprep.subr.mxu0 0.0
        %1241 = vmatpush1.msra.mxu0 0.0
        %1242 = vmatprep.subr.mxu0 0.0
        %1243 = vmatpush1.msra.mxu0 0.0
        %1244 = vmatprep.subr.mxu0 0.0
        %1245 = vmatpush1.msra.mxu0 0.0
        %1246 = vmatprep.subr.mxu0 0.0
        %1247 = vmatpush1.msra.mxu0 0.0
        %1248 = vmatprep.subr.mxu0 0.0
        %1249 = vmatpush1.msra.mxu0 0.0
        %1250 = vmatprep.subr.mxu0 0.0
        %1251 = vmatpush1.msra.mxu0 0.0
        %1252 = vmatprep.subr.mxu0 0.0
        %1253 = vmatpush1.msra.mxu0 0.0
        %1254 = vmatprep.subr.mxu0 0.0
        %1255 = vmatpush1.msra.mxu0 0.0
        %1256 = vmatprep.subr.mxu0 0.0
        %1257 = vmatpush1.msra.mxu0 0.0
        %1258 = vmatprep.subr.mxu0 0.0
        %1259 = vmatpush1.msra.mxu0 0.0
        %1260 = vmatprep.subr.mxu0 0.0
        %1261 = vmatpush1.msra.mxu0 0.0
        %1262 = vmatprep.subr.mxu0 0.0
        %1263 = vmatpush1.msra.mxu0 0.0
        %1264 = vmatprep.subr.mxu0 0.0
        %1265 = vmatpush1.msra.mxu0 0.0
        %1266 = vmatprep.subr.mxu0 0.0
        %1267 = vmatpush1.msra.mxu0 0.0
        %1268 = vmatprep.subr.mxu0 0.0
        %1269 = vmatpush1.msra.mxu0 0.0
        %1270 = vmatprep.subr.mxu0 0.0
        %1271 = vmatpush1.msra.mxu0 0.0
        %1272 = vmatprep.mubr.f32.mxu0 0.0
        %1273 = vmatmul.mubr.f32.gmra.mrb[0].mxu0 %v1206
        %v1274 = vpop.f32.mrb[0].mxu0
        %v1275 = vadd.f32 0.0, %v1274
        %v1276 = vpop.f32.mrb[0].mxu0
        %1277 = vdwg.mxu0
        %v1279 = vsel %vm1124, %v1115, 0
        %1281 = vmatprep.subr.mxu0 0.0
        %1282 = vmatpush1.msra.mxu0 %v1203
        %1283 = vmatprep.subr.mxu0 0.0
        %1284 = vmatpush1.msra.mxu0 0.0
        %1285 = vmatprep.subr.mxu0 0.0
        %1286 = vmatpush1.msra.mxu0 0.0
        %1287 = vmatprep.subr.mxu0 0.0
        %1288 = vmatpush1.msra.mxu0 0.0
        %1289 = vmatprep.subr.mxu0 0.0
        %1290 = vmatpush1.msra.mxu0 0.0
        %1291 = vmatprep.subr.mxu0 0.0
        %1292 = vmatpush1.msra.mxu0 0.0
        %1293 = vmatprep.subr.mxu0 0.0
        %1294 = vmatpush1.msra.mxu0 0.0
        %1295 = vmatprep.subr.mxu0 0.0
        %1296 = vmatpush1.msra.mxu0 0.0
        %1297 = vmatprep.subr.mxu0 0.0
        %1298 = vmatpush1.msra.mxu0 0.0
        %1299 = vmatprep.subr.mxu0 0.0
        %1300 = vmatpush1.msra.mxu0 0.0
        %1301 = vmatprep.subr.mxu0 0.0
        %1302 = vmatpush1.msra.mxu0 0.0
        %1303 = vmatprep.subr.mxu0 0.0
        %1304 = vmatpush1.msra.mxu0 0.0
        %1305 = vmatprep.subr.mxu0 0.0
        %1306 = vmatpush1.msra.mxu0 0.0
        %1307 = vmatprep.subr.mxu0 0.0
        %1308 = vmatpush1.msra.mxu0 0.0
        %1309 = vmatprep.subr.mxu0 0.0
        %1310 = vmatpush1.msra.mxu0 0.0
        %1311 = vmatprep.subr.mxu0 0.0
        %1312 = vmatpush1.msra.mxu0 0.0
        %1313 = vmatprep.subr.mxu0 0.0
        %1314 = vmatpush1.msra.mxu0 0.0
        %1315 = vmatprep.subr.mxu0 0.0
        %1316 = vmatpush1.msra.mxu0 0.0
        %1317 = vmatprep.subr.mxu0 0.0
        %1318 = vmatpush1.msra.mxu0 0.0
        %1319 = vmatprep.subr.mxu0 0.0
        %1320 = vmatpush1.msra.mxu0 0.0
        %1321 = vmatprep.subr.mxu0 0.0
        %1322 = vmatpush1.msra.mxu0 0.0
        %1323 = vmatprep.subr.mxu0 0.0
        %1324 = vmatpush1.msra.mxu0 0.0
        %1325 = vmatprep.subr.mxu0 0.0
        %1326 = vmatpush1.msra.mxu0 0.0
        %1327 = vmatprep.subr.mxu0 0.0
        %1328 = vmatpush1.msra.mxu0 0.0
        %1329 = vmatprep.subr.mxu0 0.0
        %1330 = vmatpush1.msra.mxu0 0.0
        %1331 = vmatprep.subr.mxu0 0.0
        %1332 = vmatpush1.msra.mxu0 0.0
        %1333 = vmatprep.subr.mxu0 0.0
        %1334 = vmatpush1.msra.mxu0 0.0
        %1335 = vmatprep.subr.mxu0 0.0
        %1336 = vmatpush1.msra.mxu0 0.0
        %1337 = vmatprep.subr.mxu0 0.0
        %1338 = vmatpush1.msra.mxu0 0.0
        %1339 = vmatprep.subr.mxu0 0.0
        %1340 = vmatpush1.msra.mxu0 0.0
        %1341 = vmatprep.subr.mxu0 0.0
        %1342 = vmatpush1.msra.mxu0 0.0
        %1343 = vmatprep.subr.mxu0 0.0
        %1344 = vmatpush1.msra.mxu0 0.0
        %1345 = vmatprep.mubr.f32.mxu0 0.0
        %1346 = vmatmul.mubr.f32.gmra.mrb[0].mxu0 %v1279
        %v1347 = vpop.f32.mrb[0].mxu0
        %v1348 = vadd.f32 %v1275, %v1347
        %v1349 = vpop.f32.mrb[0].mxu0
        %1350 = vdwg.mxu0
        %v1351 = vld [vmem:[%s893] sm:$0x1]
        %v1353 = vlaneseq
        %v1354 = vshrl.u32 %v1353, 7
        %v1355 = vsub.s32 0, %v1354
        %v1356 = vrot.slane %v1351, %v1355
        %v1358 = vmul.f32 %v1202, %v1356
        %v1359 = vadd.f32 %v1348, %v1358
        %v1360 = vld [vmem:[%s876] sm:$0xff]
        %v1361 = vld [vmem:[%s896] sm:$0x1]
        %1363 = vset.pattern.permute.xlu0 0
        %1364 = vperm.xlu0 %1363, %v1360
        %v1365 = vpop.permute.xlu0 %1364
        %v1368 = vlaneseq
        %v1369 = vshrl.u32 %v1368, 7
        %v1370 = vsub.s32 0, %v1369
        %v1371 = vrot.slane %v1361, %v1370
        %v1373 = vmul.f32 %v1365, %v1371
        %v1374 = vadd.f32 %v1359, %v1373
        %v1375 = vld [vmem:[%s899] sm:$0x1]
        %v1377 = vlaneseq
        %v1378 = vshrl.u32 %v1377, 7
        %v1379 = vsub.s32 0, %v1378
        %v1380 = vrot.slane %v1375, %v1379
        %v1382 = vadd.f32 %v1374, %v1380
        %v1383 = vxor.u32 %v1382, 2147483648
        %v1384 = vmul.f32 %v1383, 1.442695
        %v1385 = vpow.pop %v1384
        %v1386 = vadd.f32 %v1385, 1.0
        %v1387 = vrcp.pop %v1386
        %v1388 = vmul.f32 1.0, %v1387
        %v1389 = vmul.f32 %v1382, %v1388
        %v1390 = vld [vmem:[%s904] sm:$0xff]
        %v1391 = vld [vmem:[%s904 + $0x8] sm:$0xff]
        %v1392 = vld [vmem:[%s904 + $0x10] sm:$0xff]
        %v1393 = vld [vmem:[%s904 + $0x18] sm:$0xff]
        %v1394 = vld [vmem:[%s907] sm:$0x1]
        %v1396 = vlaneseq
        %v1397 = vshrl.u32 %v1396, 7
        %v1398 = vsub.s32 0, %v1397
        %v1399 = vrot.slane %v1394, %v1398
        %vm1401 = vcmask 261120
        %v1403 = vsel %vm1401, %v1389, 0
        %1405 = vmatprep.subr.mxu0 0.0
        %1406 = vmatpush1.msra.mxu0 %v1390
        %1407 = vmatprep.subr.mxu0 0.0
        %1408 = vmatpush1.msra.mxu0 %v1391
        %1409 = vmatprep.subr.mxu0 0.0
        %1410 = vmatpush1.msra.mxu0 %v1392
        %1411 = vmatprep.subr.mxu0 0.0
        %1412 = vmatpush1.msra.mxu0 %v1393
        %1413 = vmatprep.subr.mxu0 0.0
        %1414 = vmatpush1.msra.mxu0 0.0
        %1415 = vmatprep.subr.mxu0 0.0
        %1416 = vmatpush1.msra.mxu0 0.0
        %1417 = vmatprep.subr.mxu0 0.0
        %1418 = vmatpush1.msra.mxu0 0.0
        %1419 = vmatprep.subr.mxu0 0.0
        %1420 = vmatpush1.msra.mxu0 0.0
        %1421 = vmatprep.subr.mxu0 0.0
        %1422 = vmatpush1.msra.mxu0 0.0
        %1423 = vmatprep.subr.mxu0 0.0
        %1424 = vmatpush1.msra.mxu0 0.0
        %1425 = vmatprep.subr.mxu0 0.0
        %1426 = vmatpush1.msra.mxu0 0.0
        %1427 = vmatprep.subr.mxu0 0.0
        %1428 = vmatpush1.msra.mxu0 0.0
        %1429 = vmatprep.subr.mxu0 0.0
        %1430 = vmatpush1.msra.mxu0 0.0
        %1431 = vmatprep.subr.mxu0 0.0
        %1432 = vmatpush1.msra.mxu0 0.0
        %1433 = vmatprep.subr.mxu0 0.0
        %1434 = vmatpush1.msra.mxu0 0.0
        %1435 = vmatprep.subr.mxu0 0.0
        %1436 = vmatpush1.msra.mxu0 0.0
        %1437 = vmatprep.subr.mxu0 0.0
        %1438 = vmatpush1.msra.mxu0 0.0
        %1439 = vmatprep.subr.mxu0 0.0
        %1440 = vmatpush1.msra.mxu0 0.0
        %1441 = vmatprep.subr.mxu0 0.0
        %1442 = vmatpush1.msra.mxu0 0.0
        %1443 = vmatprep.subr.mxu0 0.0
        %1444 = vmatpush1.msra.mxu0 0.0
        %1445 = vmatprep.subr.mxu0 0.0
        %1446 = vmatpush1.msra.mxu0 0.0
        %1447 = vmatprep.subr.mxu0 0.0
        %1448 = vmatpush1.msra.mxu0 0.0
        %1449 = vmatprep.subr.mxu0 0.0
        %1450 = vmatpush1.msra.mxu0 0.0
        %1451 = vmatprep.subr.mxu0 0.0
        %1452 = vmatpush1.msra.mxu0 0.0
        %1453 = vmatprep.subr.mxu0 0.0
        %1454 = vmatpush1.msra.mxu0 0.0
        %1455 = vmatprep.subr.mxu0 0.0
        %1456 = vmatpush1.msra.mxu0 0.0
        %1457 = vmatprep.subr.mxu0 0.0
        %1458 = vmatpush1.msra.mxu0 0.0
        %1459 = vmatprep.subr.mxu0 0.0
        %1460 = vmatpush1.msra.mxu0 0.0
        %1461 = vmatprep.subr.mxu0 0.0
        %1462 = vmatpush1.msra.mxu0 0.0
        %1463 = vmatprep.subr.mxu0 0.0
        %1464 = vmatpush1.msra.mxu0 0.0
        %1465 = vmatprep.subr.mxu0 0.0
        %1466 = vmatpush1.msra.mxu0 0.0
        %1467 = vmatprep.subr.mxu0 0.0
        %1468 = vmatpush1.msra.mxu0 0.0
        %1469 = vmatprep.mubr.f32.mxu0 0.0
        %1470 = vmatmul.mubr.f32.gmra.mrb[0].mxu0 %v1403
        %v1471 = vpop.f32.mrb[0].mxu0
        %v1472 = vadd.f32 %v1399, %v1471
        %v1473 = vpop.f32.mrb[0].mxu0
        %1474 = vdwg.mxu0
        %v1475 = vxor.u32 %v1472, 2147483648
        %v1476 = vmul.f32 %v1475, 1.442695
        %v1477 = vpow.pop %v1476
        %v1478 = vadd.f32 %v1477, 1.0
        %v1479 = vrcp.pop %v1478
        %v1480 = vmul.f32 1.0, %v1479
        %v1481 = vmul.f32 %v1472, %v1480
        %v1482 = vld [vmem:[%s910] sm:$0x1]
        %v1484 = vlaneseq
        %v1485 = vshrl.u32 %v1484, 7
        %v1486 = vsub.s32 0, %v1485
        %v1487 = vrot.slane %v1482, %v1486
        %v1489 = vmul.f32 %v1481, %v1487
        %v1490 = vsel %vm1401, %v1489, 0.0
        %1491 = vadd.xlane.f32.xlu0 %v1490
        %v1492 = vpop.xlane.xlu0 %1491
        %v1493 = vld [vmem:[%s913] sm:$0x1]
        %v1495 = vlaneseq
        %v1496 = vshrl.u32 %v1495, 7
        %v1497 = vsub.s32 0, %v1496
        %v1498 = vrot.slane %v1493, %v1497
        %v1500 = vadd.f32 %v1492, %v1498
        %v1501 = vxor.u32 %v1500, 2147483648
        %v1502 = vmul.f32 %v1501, 1.442695
        %v1503 = vpow.pop %v1502
        %v1504 = vadd.f32 %v1503, 1.0
        %v1505 = vrcp.pop %v1504
        %v1506 = vmul.f32 1.0, %v1505
        %1508 = vset.pattern.permute.xlu0 0
        %1509 = vperm.xlu0 %1508, %v1506
        %v1510 = vpop.permute.xlu0 %1509
        %v1512 = vmul.f32 %v1481, %v1510
        %v1513 = vld [vmem:[%s880] sm:$0xff]
        %1515 = vset.pattern.permute.xlu0 0
        %1516 = vperm.xlu0 %1515, %v1513
        %v1517 = vpop.permute.xlu0 %1516
        %v1519 = vmul.f32 %v1512, %v1517
        %v1520 = vld [vmem:[#allocation3] sm:$0xff]
        %1521 = vxpose.xlu0.b32.start [1/16] %v1115, 128
        %1522 = vxpose.xlu0.b32.cont [2/16] 0.0, 128
        %1523 = vxpose.xlu0.b32.cont [3/16] 0.0, 128
        %1524 = vxpose.xlu0.b32.cont [4/16] 0.0, 128
        %1525 = vxpose.xlu0.b32.cont [5/16] 0.0, 128
        %1526 = vxpose.xlu0.b32.cont [6/16] 0.0, 128
        %1527 = vxpose.xlu0.b32.cont [7/16] 0.0, 128
        %1528 = vxpose.xlu0.b32.cont [8/16] 0.0, 128
        %1529 = vxpose.xlu0.b32.cont [9/16] 0.0, 128
        %1530 = vxpose.xlu0.b32.cont [10/16] 0.0, 128
        %1531 = vxpose.xlu0.b32.cont [11/16] 0.0, 128
        %1532 = vxpose.xlu0.b32.cont [12/16] 0.0, 128
        %1533 = vxpose.xlu0.b32.cont [13/16] 0.0, 128
        %1534 = vxpose.xlu0.b32.cont [14/16] 0.0, 128
        %1535 = vxpose.xlu0.b32.cont [15/16] 0.0, 128
        %1536 = vxpose.xlu0.b32.end [16/16] 0.0, 128
        %v1537 = vpop.trf.xlu0
        %v1538 = vpop.trf.xlu0
        %v1539 = vpop.trf.xlu0
        %v1540 = vpop.trf.xlu0
        %v1541 = vpop.trf.xlu0
        %v1542 = vpop.trf.xlu0
        %v1543 = vpop.trf.xlu0
        %v1544 = vpop.trf.xlu0
        %v1545 = vpop.trf.xlu0
        %v1546 = vpop.trf.xlu0
        %v1547 = vpop.trf.xlu0
        %v1548 = vpop.trf.xlu0
        %v1549 = vpop.trf.xlu0
        %v1550 = vpop.trf.xlu0
        %v1551 = vpop.trf.xlu0
        %v1552 = vpop.trf.xlu0
        %v1554 = vsel %vm1124, %v1537, 0
        %1556 = vmatprep.subr.mxu0 0.0
        %1557 = vmatpush1.msra.mxu0 %v1519
        %1558 = vmatprep.subr.mxu0 0.0
        %1559 = vmatpush1.msra.mxu0 0.0
        %1560 = vmatprep.subr.mxu0 0.0
        %1561 = vmatpush1.msra.mxu0 0.0
        %1562 = vmatprep.subr.mxu0 0.0
        %1563 = vmatpush1.msra.mxu0 0.0
        %1564 = vmatprep.subr.mxu0 0.0
        %1565 = vmatpush1.msra.mxu0 0.0
        %1566 = vmatprep.subr.mxu0 0.0
        %1567 = vmatpush1.msra.mxu0 0.0
        %1568 = vmatprep.subr.mxu0 0.0
        %1569 = vmatpush1.msra.mxu0 0.0
        %1570 = vmatprep.subr.mxu0 0.0
        %1571 = vmatpush1.msra.mxu0 0.0
        %1572 = vmatprep.subr.mxu0 0.0
        %1573 = vmatpush1.msra.mxu0 0.0
        %1574 = vmatprep.subr.mxu0 0.0
        %1575 = vmatpush1.msra.mxu0 0.0
        %1576 = vmatprep.subr.mxu0 0.0
        %1577 = vmatpush1.msra.mxu0 0.0
        %1578 = vmatprep.subr.mxu0 0.0
        %1579 = vmatpush1.msra.mxu0 0.0
        %1580 = vmatprep.subr.mxu0 0.0
        %1581 = vmatpush1.msra.mxu0 0.0
        %1582 = vmatprep.subr.mxu0 0.0
        %1583 = vmatpush1.msra.mxu0 0.0
        %1584 = vmatprep.subr.mxu0 0.0
        %1585 = vmatpush1.msra.mxu0 0.0
        %1586 = vmatprep.subr.mxu0 0.0
        %1587 = vmatpush1.msra.mxu0 0.0
        %1588 = vmatprep.subr.mxu0 0.0
        %1589 = vmatpush1.msra.mxu0 0.0
        %1590 = vmatprep.subr.mxu0 0.0
        %1591 = vmatpush1.msra.mxu0 0.0
        %1592 = vmatprep.subr.mxu0 0.0
        %1593 = vmatpush1.msra.mxu0 0.0
        %1594 = vmatprep.subr.mxu0 0.0
        %1595 = vmatpush1.msra.mxu0 0.0
        %1596 = vmatprep.subr.mxu0 0.0
        %1597 = vmatpush1.msra.mxu0 0.0
        %1598 = vmatprep.subr.mxu0 0.0
        %1599 = vmatpush1.msra.mxu0 0.0
        %1600 = vmatprep.subr.mxu0 0.0
        %1601 = vmatpush1.msra.mxu0 0.0
        %1602 = vmatprep.subr.mxu0 0.0
        %1603 = vmatpush1.msra.mxu0 0.0
        %1604 = vmatprep.subr.mxu0 0.0
        %1605 = vmatpush1.msra.mxu0 0.0
        %1606 = vmatprep.subr.mxu0 0.0
        %1607 = vmatpush1.msra.mxu0 0.0
        %1608 = vmatprep.subr.mxu0 0.0
        %1609 = vmatpush1.msra.mxu0 0.0
        %1610 = vmatprep.subr.mxu0 0.0
        %1611 = vmatpush1.msra.mxu0 0.0
        %1612 = vmatprep.subr.mxu0 0.0
        %1613 = vmatpush1.msra.mxu0 0.0
        %1614 = vmatprep.subr.mxu0 0.0
        %1615 = vmatpush1.msra.mxu0 0.0
        %1616 = vmatprep.subr.mxu0 0.0
        %1617 = vmatpush1.msra.mxu0 0.0
        %1618 = vmatprep.subr.mxu0 0.0
        %1619 = vmatpush1.msra.mxu0 0.0
        %1620 = vmatprep.mubr.f32.mxu0 0.0
        %1621 = vmatmul.mubr.f32.gmra.mrb[0].mxu0 %v1554
        %v1622 = vpop.f32.mrb[0].mxu0
        %v1623 = vadd.f32 0.0, %v1622
        %v1624 = vpop.f32.mrb[0].mxu0
        %1625 = vdwg.mxu0
        %v1626 = vadd.f32 %v1520, %v1623
        %1627 = vst.msk [vmem:[#allocation3] sm:$0xff] %vm1401, %v1626
        %p1628 = scmp.eq.s32.totalorder %s38, 2
        // Predicated region
        $region113: #{equivariant_block.1} parent=103 // pred_check
          %p1629 = pneg %p1628
        $region114: #{equivariant_block.1} parent=103 // pred_check_branch
          %1631 = sbr.rel (%p1629) target = $region116
        $region115: #{equivariant_block.1} parent=103 // pred_region
          %v1632 = vld [vmem:[%s2] sm:$0xff]
          %v1633 = vld [vmem:[#allocation2] sm:$0xff]
          %v1634 = vld [vmem:[%s918] sm:$0xff]
          %v1635 = vld [vmem:[%s918 + $0x8] sm:$0xff]
          %v1636 = vld [vmem:[%s918 + $0x10] sm:$0xff]
          %v1637 = vld [vmem:[%s918 + $0x18] sm:$0xff]
          %v1638 = vld [vmem:[#allocation3] sm:$0xff]
          %v1639 = vld [vmem:[%s923] sm:$0xff]
          %v1640 = vld [vmem:[%s923 + $0x8] sm:$0xff]
          %v1641 = vld [vmem:[%s923 + $0x10] sm:$0xff]
          %v1642 = vld [vmem:[%s923 + $0x18] sm:$0xff]
          %v1644 = vsel %vm1401, %v1638, 0
          %1646 = vmatprep.subr.mxu0 0.0
          %1647 = vmatpush1.msra.mxu0 %v1639
          %1648 = vmatprep.subr.mxu0 0.0
          %1649 = vmatpush1.msra.mxu0 %v1640
          %1650 = vmatprep.subr.mxu0 0.0
          %1651 = vmatpush1.msra.mxu0 %v1641
          %1652 = vmatprep.subr.mxu0 0.0
          %1653 = vmatpush1.msra.mxu0 %v1642
          %1654 = vmatprep.subr.mxu0 0.0
          %1655 = vmatpush1.msra.mxu0 0.0
          %1656 = vmatprep.subr.mxu0 0.0
          %1657 = vmatpush1.msra.mxu0 0.0
          %1658 = vmatprep.subr.mxu0 0.0
          %1659 = vmatpush1.msra.mxu0 0.0
          %1660 = vmatprep.subr.mxu0 0.0
          %1661 = vmatpush1.msra.mxu0 0.0
          %1662 = vmatprep.subr.mxu0 0.0
          %1663 = vmatpush1.msra.mxu0 0.0
          %1664 = vmatprep.subr.mxu0 0.0
          %1665 = vmatpush1.msra.mxu0 0.0
          %1666 = vmatprep.subr.mxu0 0.0
          %1667 = vmatpush1.msra.mxu0 0.0
          %1668 = vmatprep.subr.mxu0 0.0
          %1669 = vmatpush1.msra.mxu0 0.0
          %1670 = vmatprep.subr.mxu0 0.0
          %1671 = vmatpush1.msra.mxu0 0.0
          %1672 = vmatprep.subr.mxu0 0.0
          %1673 = vmatpush1.msra.mxu0 0.0
          %1674 = vmatprep.subr.mxu0 0.0
          %1675 = vmatpush1.msra.mxu0 0.0
          %1676 = vmatprep.subr.mxu0 0.0
          %1677 = vmatpush1.msra.mxu0 0.0
          %1678 = vmatprep.subr.mxu0 0.0
          %1679 = vmatpush1.msra.mxu0 0.0
          %1680 = vmatprep.subr.mxu0 0.0
          %1681 = vmatpush1.msra.mxu0 0.0
          %1682 = vmatprep.subr.mxu0 0.0
          %1683 = vmatpush1.msra.mxu0 0.0
          %1684 = vmatprep.subr.mxu0 0.0
          %1685 = vmatpush1.msra.mxu0 0.0
          %1686 = vmatprep.subr.mxu0 0.0
          %1687 = vmatpush1.msra.mxu0 0.0
          %1688 = vmatprep.subr.mxu0 0.0
          %1689 = vmatpush1.msra.mxu0 0.0
          %1690 = vmatprep.subr.mxu0 0.0
          %1691 = vmatpush1.msra.mxu0 0.0
          %1692 = vmatprep.subr.mxu0 0.0
          %1693 = vmatpush1.msra.mxu0 0.0
          %1694 = vmatprep.subr.mxu0 0.0
          %1695 = vmatpush1.msra.mxu0 0.0
          %1696 = vmatprep.subr.mxu0 0.0
          %1697 = vmatpush1.msra.mxu0 0.0
          %1698 = vmatprep.subr.mxu0 0.0
          %1699 = vmatpush1.msra.mxu0 0.0
          %1700 = vmatprep.subr.mxu0 0.0
          %1701 = vmatpush1.msra.mxu0 0.0
          %1702 = vmatprep.subr.mxu0 0.0
          %1703 = vmatpush1.msra.mxu0 0.0
          %1704 = vmatprep.subr.mxu0 0.0
          %1705 = vmatpush1.msra.mxu0 0.0
          %1706 = vmatprep.subr.mxu0 0.0
          %1707 = vmatpush1.msra.mxu0 0.0
          %1708 = vmatprep.subr.mxu0 0.0
          %1709 = vmatpush1.msra.mxu0 0.0
          %1710 = vmatprep.mubr.f32.mxu0 0.0
          %1711 = vmatmul.mubr.f32.gmra.mrb[0].mxu0 %v1644
          %v1712 = vpop.f32.mrb[0].mxu0
          %v1713 = vadd.f32 0.0, %v1712
          %v1714 = vpop.f32.mrb[0].mxu0
          %1715 = vdwg.mxu0
          %v1717 = vsel %vm1401, %v1633, 0
          %1719 = vmatprep.subr.mxu0 0.0
          %1720 = vmatpush1.msra.mxu0 %v1634
          %1721 = vmatprep.subr.mxu0 0.0
          %1722 = vmatpush1.msra.mxu0 %v1635
          %1723 = vmatprep.subr.mxu0 0.0
          %1724 = vmatpush1.msra.mxu0 %v1636
          %1725 = vmatprep.subr.mxu0 0.0
          %1726 = vmatpush1.msra.mxu0 %v1637
          %1727 = vmatprep.subr.mxu0 0.0
          %1728 = vmatpush1.msra.mxu0 0.0
          %1729 = vmatprep.subr.mxu0 0.0
          %1730 = vmatpush1.msra.mxu0 0.0
          %1731 = vmatprep.subr.mxu0 0.0
          %1732 = vmatpush1.msra.mxu0 0.0
          %1733 = vmatprep.subr.mxu0 0.0
          %1734 = vmatpush1.msra.mxu0 0.0
          %1735 = vmatprep.subr.mxu0 0.0
          %1736 = vmatpush1.msra.mxu0 0.0
          %1737 = vmatprep.subr.mxu0 0.0
          %1738 = vmatpush1.msra.mxu0 0.0
          %1739 = vmatprep.subr.mxu0 0.0
          %1740 = vmatpush1.msra.mxu0 0.0
          %1741 = vmatprep.subr.mxu0 0.0
          %1742 = vmatpush1.msra.mxu0 0.0
          %1743 = vmatprep.subr.mxu0 0.0
          %1744 = vmatpush1.msra.mxu0 0.0
          %1745 = vmatprep.subr.mxu0 0.0
          %1746 = vmatpush1.msra.mxu0 0.0
          %1747 = vmatprep.subr.mxu0 0.0
          %1748 = vmatpush1.msra.mxu0 0.0
          %1749 = vmatprep.subr.mxu0 0.0
          %1750 = vmatpush1.msra.mxu0 0.0
          %1751 = vmatprep.subr.mxu0 0.0
          %1752 = vmatpush1.msra.mxu0 0.0
          %1753 = vmatprep.subr.mxu0 0.0
          %1754 = vmatpush1.msra.mxu0 0.0
          %1755 = vmatprep.subr.mxu0 0.0
          %1756 = vmatpush1.msra.mxu0 0.0
          %1757 = vmatprep.subr.mxu0 0.0
          %1758 = vmatpush1.msra.mxu0 0.0
          %1759 = vmatprep.subr.mxu0 0.0
          %1760 = vmatpush1.msra.mxu0 0.0
          %1761 = vmatprep.subr.mxu0 0.0
          %1762 = vmatpush1.msra.mxu0 0.0
          %1763 = vmatprep.subr.mxu0 0.0
          %1764 = vmatpush1.msra.mxu0 0.0
          %1765 = vmatprep.subr.mxu0 0.0
          %1766 = vmatpush1.msra.mxu0 0.0
          %1767 = vmatprep.subr.mxu0 0.0
          %1768 = vmatpush1.msra.mxu0 0.0
          %1769 = vmatprep.subr.mxu0 0.0
          %1770 = vmatpush1.msra.mxu0 0.0
          %1771 = vmatprep.subr.mxu0 0.0
          %1772 = vmatpush1.msra.mxu0 0.0
          %1773 = vmatprep.subr.mxu0 0.0
          %1774 = vmatpush1.msra.mxu0 0.0
          %1775 = vmatprep.subr.mxu0 0.0
          %1776 = vmatpush1.msra.mxu0 0.0
          %1777 = vmatprep.subr.mxu0 0.0
          %1778 = vmatpush1.msra.mxu0 0.0
          %1779 = vmatprep.subr.mxu0 0.0
          %1780 = vmatpush1.msra.mxu0 0.0
          %1781 = vmatprep.subr.mxu0 0.0
          %1782 = vmatpush1.msra.mxu0 0.0
          %1783 = vmatprep.mubr.f32.mxu0 0.0
          %1784 = vmatmul.mubr.f32.gmra.mrb[0].mxu0 %v1717
          %v1785 = vpop.f32.mrb[0].mxu0
          %v1786 = vadd.f32 %v1713, %v1785
          %v1787 = vpop.f32.mrb[0].mxu0
          %1788 = vdwg.mxu0
          %v1789 = vld [vmem:[%s926] sm:$0x1]
          %v1791 = vlaneseq
          %v1792 = vshrl.u32 %v1791, 7
          %v1793 = vsub.s32 0, %v1792
          %v1794 = vrot.slane %v1789, %v1793
          %v1796 = vadd.f32 %v1786, %v1794
          %v1797 = vxor.u32 %v1796, 2147483648
          %v1798 = vmul.f32 %v1797, 1.442695
          %v1799 = vpow.pop %v1798
          %v1800 = vadd.f32 %v1799, 1.0
          %v1801 = vrcp.pop %v1800
          %v1802 = vmul.f32 1.0, %v1801
          %v1803 = vmul.f32 %v1796, %v1802
          %v1804 = vld [vmem:[%s931] sm:$0xff]
          %v1805 = vld [vmem:[%s931 + $0x8] sm:$0xff]
          %v1806 = vld [vmem:[%s931 + $0x10] sm:$0xff]
          %v1807 = vld [vmem:[%s931 + $0x18] sm:$0xff]
          %v1809 = vsel %vm1401, %v1803, 0
          %1811 = vmatprep.subr.mxu0 0.0
          %1812 = vmatpush1.msra.mxu0 %v1804
          %1813 = vmatprep.subr.mxu0 0.0
          %1814 = vmatpush1.msra.mxu0 %v1805
          %1815 = vmatprep.subr.mxu0 0.0
          %1816 = vmatpush1.msra.mxu0 %v1806
          %1817 = vmatprep.subr.mxu0 0.0
          %1818 = vmatpush1.msra.mxu0 %v1807
          %1819 = vmatprep.subr.mxu0 0.0
          %1820 = vmatpush1.msra.mxu0 0.0
          %1821 = vmatprep.subr.mxu0 0.0
          %1822 = vmatpush1.msra.mxu0 0.0
          %1823 = vmatprep.subr.mxu0 0.0
          %1824 = vmatpush1.msra.mxu0 0.0
          %1825 = vmatprep.subr.mxu0 0.0
          %1826 = vmatpush1.msra.mxu0 0.0
          %1827 = vmatprep.subr.mxu0 0.0
          %1828 = vmatpush1.msra.mxu0 0.0
          %1829 = vmatprep.subr.mxu0 0.0
          %1830 = vmatpush1.msra.mxu0 0.0
          %1831 = vmatprep.subr.mxu0 0.0
          %1832 = vmatpush1.msra.mxu0 0.0
          %1833 = vmatprep.subr.mxu0 0.0
          %1834 = vmatpush1.msra.mxu0 0.0
          %1835 = vmatprep.subr.mxu0 0.0
          %1836 = vmatpush1.msra.mxu0 0.0
          %1837 = vmatprep.subr.mxu0 0.0
          %1838 = vmatpush1.msra.mxu0 0.0
          %1839 = vmatprep.subr.mxu0 0.0
          %1840 = vmatpush1.msra.mxu0 0.0
          %1841 = vmatprep.subr.mxu0 0.0
          %1842 = vmatpush1.msra.mxu0 0.0
          %1843 = vmatprep.subr.mxu0 0.0
          %1844 = vmatpush1.msra.mxu0 0.0
          %1845 = vmatprep.subr.mxu0 0.0
          %1846 = vmatpush1.msra.mxu0 0.0
          %1847 = vmatprep.subr.mxu0 0.0
          %1848 = vmatpush1.msra.mxu0 0.0
          %1849 = vmatprep.subr.mxu0 0.0
          %1850 = vmatpush1.msra.mxu0 0.0
          %1851 = vmatprep.subr.mxu0 0.0
          %1852 = vmatpush1.msra.mxu0 0.0
          %1853 = vmatprep.subr.mxu0 0.0
          %1854 = vmatpush1.msra.mxu0 0.0
          %1855 = vmatprep.subr.mxu0 0.0
          %1856 = vmatpush1.msra.mxu0 0.0
          %1857 = vmatprep.subr.mxu0 0.0
          %1858 = vmatpush1.msra.mxu0 0.0
          %1859 = vmatprep.subr.mxu0 0.0
          %1860 = vmatpush1.msra.mxu0 0.0
          %1861 = vmatprep.subr.mxu0 0.0
          %1862 = vmatpush1.msra.mxu0 0.0
          %1863 = vmatprep.subr.mxu0 0.0
          %1864 = vmatpush1.msra.mxu0 0.0
          %1865 = vmatprep.subr.mxu0 0.0
          %1866 = vmatpush1.msra.mxu0 0.0
          %1867 = vmatprep.subr.mxu0 0.0
          %1868 = vmatpush1.msra.mxu0 0.0
          %1869 = vmatprep.subr.mxu0 0.0
          %1870 = vmatpush1.msra.mxu0 0.0
          %1871 = vmatprep.subr.mxu0 0.0
          %1872 = vmatpush1.msra.mxu0 0.0
          %1873 = vmatprep.subr.mxu0 0.0
          %1874 = vmatpush1.msra.mxu0 0.0
          %1875 = vmatprep.mubr.f32.mxu0 0.0
          %1876 = vmatmul.mubr.f32.gmra.mrb[0].mxu0 %v1809
          %v1877 = vpop.f32.mrb[0].mxu0
          %v1878 = vadd.f32 0.0, %v1877
          %v1879 = vpop.f32.mrb[0].mxu0
          %1880 = vdwg.mxu0
          %v1881 = vadd.f32 %v1633, %v1878
          %v1882 = vld [vmem:[%s934] sm:$0x1]
          %v1884 = vlaneseq
          %v1885 = vshrl.u32 %v1884, 7
          %v1886 = vsub.s32 0, %v1885
          %v1887 = vrot.slane %v1882, %v1886
          %v1889 = vadd.f32 %v1881, %v1887
          %1891 = vset.pattern.permute.xlu0 0
          %1892 = vperm.xlu0 %1891, %v1632
          %v1893 = vpop.permute.xlu0 %1892
          %v1895 = vmul.f32 %v1889, %v1893
          %1896 = vst.msk [vmem:[#allocation2] sm:$0xff] %vm1401, %v1895
          %p1897 = scmp.eq.s32.totalorder %s37, 1
          // Predicated region
          $region117: #{equivariant_block.1} parent=115 // pred_check
            %p1898 = pneg %p1897
          $region118: #{equivariant_block.1} parent=115 // pred_check_branch
            %1900 = sbr.rel (%p1898) target = $region120
          $region119: #{equivariant_block.1} parent=115 // pred_region
            %v1901 = vmul.f32 %v1895, %v1893
            %1902 = vst.msk [vmem:[#allocation6] sm:$0xff] %vm1401, %v1901
          $region120: #{equivariant_block.1} parent=115 // pred_fallthru
            _
        $region116: #{equivariant_block.1} parent=103 // pred_fallthru
          _
        // Predicated region
        $region121: #{equivariant_block.1} parent=103 // pred_check
          %p1903 = pneg %p589
        $region122: #{equivariant_block.1} parent=103 // pred_check_branch
          %1905 = sbr.rel (%p1903) target = $region124
        $region123: #{equivariant_block.1} parent=103 // pred_region
          %s1907 = ssub.s32 128, 128
          %1908 = vsyncadd [#allocation7], %s1907
          %s1910 = sshll.u32 [#allocation6], 4
          %s1911 = int_to_ptr.vmem [resolvable:$true] %s1910
          %1913 = dma.vmem_to_hbm [thread:$0]  %s1911, 128, %s21, [#allocation7]
        $region124: #{equivariant_block.1} parent=103 // pred_fallthru
          _
        // Predicated region
        $region125: #{equivariant_block.1} parent=103 // pred_check
          %p1914 = pneg %p589
        $region126: #{equivariant_block.1} parent=103 // pred_check_branch
          %1916 = sbr.rel (%p1914) target = $region128
        $region127: #{equivariant_block.1} parent=103 // pred_region
          %1917 = dma.done [#allocation7], 128
        $region128: #{equivariant_block.1} parent=103 // pred_fallthru
          _
      $region104: #{equivariant_block.1} parent=5 // pred_fallthru
        _
      %p1918 = scmp.le.s32.totalorder 2, %s28
      // Predicated region
      $region129: #{equivariant_block.1} parent=5 // pred_check
        %p1919 = pneg %p1918
      $region130: #{equivariant_block.1} parent=5 // pred_check_branch
        %1921 = sbr.rel (%p1919) target = $region132
      $region131: #{equivariant_block.1} parent=5 // pred_region
        %s1922 = ssub.s32 %s28, 2
      $region132: #{equivariant_block.1} parent=5 // pred_fallthru
        _
    $region6: #{equivariant_block.1} parent=1 // loop_footer
      %s32 = sadd.s32 1, %s28
    $region7: #{equivariant_block.1} parent=1 // loop_footer_branch
      %27 = sbr.rel target = $region3
    $region8: #{equivariant_block.1} parent=1 // loop_exit
      _
    %1923 = vsyncpa [#allocation7], 1
    %s1924 = scalar_lea.sflag [#allocation7], 1
    %1925 = vsyncpa %s1924, 1

</llo_original>
